<compile_context>
chip_gen: v6e
topology: v6e:2x2x1
jax: 0.10.0
libtpu: 0.0.40
codegen_flags: <defaults>
</compile_context>

<pallas_src>
import numpy as np
import jax
import jax.numpy as jnp
from jax.experimental import pallas as pl
from jax.experimental.pallas import tpu as pltpu


def gcl_kernel(st_ref, x_ref, row_ref,
               w1_ref, b1_ref, w2_ref, b2_ref,
               w3_ref, b3_ref, w4_ref, b4_ref,
               o_ref):
    Bb, Ep, D2 = st_ref.shape          # pre-gathered [src || tgt] edge features (bf16)
    _, Np, Dp = x_ref.shape
    Hp = w2_ref.shape[1]
    f32, bf16 = jnp.float32, jnp.bfloat16

    # ---- edge MLP: fold all Bb graphs' edges onto the M (row) axis -------------
    st = st_ref[...].reshape(Bb * Ep, D2)                                    # bf16
    h1 = jnp.dot(st, w1_ref[...], preferred_element_type=f32) + b1_ref[...]
    h1 = jnp.maximum(h1, 0.0)
    ef = jnp.dot(h1.astype(bf16), w2_ref[...], preferred_element_type=f32) + b2_ref[...]
    ef = jnp.maximum(ef, 0.0)                                                # f32 [Bb*Ep, Hp]
    ef_b16 = ef.astype(bf16)

    # ---- scatter-sum (segment_sum over row): build one-hot^T in VMEM ----------
    # Padded dummy edges have row index == Np, which never matches iota < Np,
    # so they contribute exactly zero.
    rows = row_ref[...]                                                      # [1, Ep] int32
    n_iota = jax.lax.broadcasted_iota(jnp.int32, (Np, Ep), 0)
    scat = (n_iota == rows).astype(bf16)                                     # [Np, Ep]
    aggs = [
        jnp.dot(scat, ef_b16[b * Ep:(b + 1) * Ep, :], preferred_element_type=f32)
        for b in range(Bb)
    ]
    agg = jnp.concatenate(aggs, axis=0)                                      # f32 [Bb*Np, Hp]

    # ---- node MLP + recurrent residual ----------------------------------------
    x = x_ref[...].reshape(Bb * Np, Dp)                                      # f32
    xa = jnp.concatenate([x.astype(bf16), agg.astype(bf16)], axis=-1)        # [Bb*Np, Dp+Hp]
    h3 = jnp.dot(xa, w3_ref[...], preferred_element_type=f32) + b3_ref[...]
    h3 = jnp.maximum(h3, 0.0)
    out = (jnp.dot(h3.astype(bf16), w4_ref[...], preferred_element_type=f32)
           + b4_ref[...] + x)                                                # f32 residual
    o_ref[...] = out.reshape(Bb, Np, Dp).astype(o_ref.dtype)


def gcl_forward(x, edge_index, params, *, block_b=None):
    """x: [B, N, D] f32; edge_index: (row, col) int arrays of length E."""
    B, N, D = x.shape
    row, col = edge_index
    E = int(row.shape[0])
    H = params["w2"].shape[1]
    f32, bf16 = jnp.float32, jnp.bfloat16

    _ru = lambda v, m: pl.cdiv(v, m) * m
    LANE = 128
    Dp = _ru(D, LANE)                  # pad feature dims to full lanes
    Hp = _ru(H, LANE)
    Np = _ru(N, 8)                     # sublane-aligned node count (f32 tiling)
    Ep = _ru(E, 16)                    # sublane-aligned edge count (bf16 tiling)

    if block_b is None:
        block_b = 2 if B % 2 == 0 else 1
    assert B % block_b == 0, "batch must be divisible by block_b"
    grid_b = B // block_b

    # ---- host-side glue (cheap XLA): pad, gather, pack --------------------------
    xp = jnp.zeros((B, Np, Dp), f32).at[:, :N, :D].set(x)
    src = jnp.take(xp, row, axis=1)                                          # [B, E, Dp]
    tgt = jnp.take(xp, col, axis=1)                                          # [B, E, Dp]
    st = jnp.concatenate([src, tgt], axis=-1).astype(bf16)                   # [B, E, 2Dp]
    st = jnp.zeros((B, Ep, 2 * Dp), bf16).at[:, :E, :].set(st)
    # dummy (padded) edges point at node index Np -> matched by nothing -> zero agg
    row_p = jnp.full((1, Ep), Np, jnp.int32).at[0, :E].set(row.astype(jnp.int32))

    # fused + padded weights (bf16 for the MXU), biases stay f32
    w1 = (jnp.zeros((2 * Dp, Hp), f32)
          .at[:D, :H].set(params["w1_src"])
          .at[Dp:Dp + D, :H].set(params["w1_tgt"])).astype(bf16)
    w2 = jnp.zeros((Hp, Hp), f32).at[:H, :H].set(params["w2"]).astype(bf16)
    w3 = (jnp.zeros((Dp + Hp, Hp), f32)
          .at[:D, :H].set(params["w3_x"])
          .at[Dp:Dp + H, :H].set(params["w3_agg"])).astype(bf16)
    w4 = jnp.zeros((Hp, Dp), f32).at[:H, :D].set(params["w4"]).astype(bf16)
    b1 = jnp.zeros((1, Hp), f32).at[:, :H].set(params["b1"])
    b2 = jnp.zeros((1, Hp), f32).at[:, :H].set(params["b2"])
    b3 = jnp.zeros((1, Hp), f32).at[:, :H].set(params["b3"])
    b4 = jnp.zeros((1, Dp), f32).at[:, :D].set(params["b4"])

    const2 = lambda shape: pl.BlockSpec(shape, lambda b: (0, 0))

    out = pl.pallas_call(
        gcl_kernel,
        out_shape=jax.ShapeDtypeStruct((B, Np, Dp), f32),
        grid=(grid_b,),
        in_specs=[
            pl.BlockSpec((block_b, Ep, 2 * Dp), lambda b: (b, 0, 0)),  # streamed edge feats
            pl.BlockSpec((block_b, Np, Dp), lambda b: (b, 0, 0)),      # streamed node feats
            const2((1, Ep)),                                           # row indices
            const2((2 * Dp, Hp)), const2((1, Hp)),                     # edge MLP layer 1 (fused)
            const2((Hp, Hp)), const2((1, Hp)),                         # edge MLP layer 2
            const2((Dp + Hp, Hp)), const2((1, Hp)),                    # node MLP layer 1 (fused)
            const2((Hp, Dp)), const2((1, Dp)),                         # node MLP layer 2
        ],
        out_specs=pl.BlockSpec((block_b, Np, Dp), lambda b: (b, 0, 0)),
        compiler_params=pltpu.CompilerParams(
            dimension_semantics=("parallel",)),
    )(st, xp, row_p, w1, b1, w2, b2, w3, b3, w4, b4)

    return out[:, :N, :D], None   # matches (xs, None)


def init_params(key, D, H):
    ks = jax.random.split(key, 8)
    s = 0.1
    return {
        # edge MLP: Linear(2D -> H), ReLU, Linear(H -> H), ReLU
        "w1_src": s * jax.random.normal(ks[0], (D, H), jnp.float32),
        "w1_tgt": s * jax.random.normal(ks[1], (D, H), jnp.float32),
        "b1":     s * jax.random.normal(ks[2], (1, H), jnp.float32),
        "w2":     s * jax.random.normal(ks[3], (H, H), jnp.float32),
        "b2":     jnp.zeros((1, H), jnp.float32),
        # node MLP: Linear(D+H -> H), ReLU, Linear(H -> D)   (+ residual)
        "w3_x":   s * jax.random.normal(ks[4], (D, H), jnp.float32),
        "w3_agg": s * jax.random.normal(ks[5], (H, H), jnp.float32),
        "b3":     jnp.zeros((1, H), jnp.float32),
        "w4":     s * jax.random.normal(ks[6], (H, D), jnp.float32),
        "b4":     s * jax.random.normal(ks[7], (1, D), jnp.float32),
    }


def gcl_reference(x, edge_index, params):
    """Pure-JAX reference with the same semantics and the same bf16 MXU numerics."""
    row, col = edge_index
    bf = jnp.bfloat16
    mm = lambda a, b: jnp.dot(a.astype(bf), b.astype(bf),
                              preferred_element_type=jnp.float32)
    w1 = jnp.concatenate([params["w1_src"], params["w1_tgt"]], axis=0)
    w3 = jnp.concatenate([params["w3_x"], params["w3_agg"]], axis=0)
    outs = []
    for i in range(x.shape[0]):
        xi = x[i]
        st = jnp.concatenate([xi[row], xi[col]], axis=-1)
        h1 = jnp.maximum(mm(st, w1) + params["b1"], 0.0)
        ef = jnp.maximum(mm(h1, params["w2"]) + params["b2"], 0.0)
        ef = ef.astype(bf).astype(jnp.float32)          # matches kernel's bf16 scatter operand
        agg = jax.ops.segment_sum(ef, row, num_segments=xi.shape[0])
        h3 = jnp.maximum(mm(jnp.concatenate([xi, agg], axis=-1), w3) + params["b3"], 0.0)
        outs.append(mm(h3, params["w4"]) + params["b4"] + xi)
    return jnp.stack(outs), None


if __name__ == "__main__":
    B, N, D, H = 4, 8, 32, 32
    key = jax.random.PRNGKey(0)
    kx, kp = jax.random.split(key)

    x = jax.random.normal(kx, (B, N, D), jnp.float32)

    # fully-connected graph without self loops (shared edge_index across batch)
    rows, cols = [], []
    for i in range(N):
        for j in range(N):
            if i != j:
                rows.append(i)
                cols.append(j)
    edge_index = (jnp.array(rows, jnp.int32), jnp.array(cols, jnp.int32))

    params = init_params(kp, D, H)

    xs, _ = gcl_forward(x, edge_index, params, block_b=2)
    xs = jax.block_until_ready(xs)

    ref, _ = gcl_reference(x, edge_index, params)
    np.testing.assert_allclose(np.asarray(xs), np.asarray(ref), rtol=5e-3, atol=5e-3)

    print("KERNEL_OK")
</pallas_src>

<mosaic_0001>
module attributes {stable_mosaic.version = 11 : i64} {
  func.func @gcl_kernel(%arg0: i32, %arg1: memref<2x64x256xbf16, #tpu.memory_space<vmem>>, %arg2: memref<2x8x128xf32, #tpu.memory_space<vmem>>, %arg3: memref<1x64xi32, #tpu.memory_space<vmem>>, %arg4: memref<256x128xbf16, #tpu.memory_space<vmem>>, %arg5: memref<1x128xf32, #tpu.memory_space<vmem>>, %arg6: memref<128x128xbf16, #tpu.memory_space<vmem>>, %arg7: memref<1x128xf32, #tpu.memory_space<vmem>>, %arg8: memref<256x128xbf16, #tpu.memory_space<vmem>>, %arg9: memref<1x128xf32, #tpu.memory_space<vmem>>, %arg10: memref<128x128xbf16, #tpu.memory_space<vmem>>, %arg11: memref<1x128xf32, #tpu.memory_space<vmem>>, %arg12: memref<2x8x128xf32, #tpu.memory_space<vmem>>) attributes {dimension_semantics = [#tpu.dimension_semantics<parallel>], iteration_bounds = array<i64: 2>, scalar_prefetch = 0 : i64, scratch_operands = 0 : i64, tpu.core_type = #tpu.core_type<tc>, window_params = [{transform_indices = @transform_0, window_bounds = array<i64: 2, 64, 256>}, {transform_indices = @transform_1, window_bounds = array<i64: 2, 8, 128>}, {pipeline_mode = #tpu.pipeline_mode<synchronous>, transform_indices = @transform_2, window_bounds = array<i64: 1, 64>}, {pipeline_mode = #tpu.pipeline_mode<synchronous>, transform_indices = @transform_3, window_bounds = array<i64: 256, 128>}, {pipeline_mode = #tpu.pipeline_mode<synchronous>, transform_indices = @transform_4, window_bounds = array<i64: 1, 128>}, {pipeline_mode = #tpu.pipeline_mode<synchronous>, transform_indices = @transform_5, window_bounds = array<i64: 128, 128>}, {pipeline_mode = #tpu.pipeline_mode<synchronous>, transform_indices = @transform_6, window_bounds = array<i64: 1, 128>}, {pipeline_mode = #tpu.pipeline_mode<synchronous>, transform_indices = @transform_7, window_bounds = array<i64: 256, 128>}, {pipeline_mode = #tpu.pipeline_mode<synchronous>, transform_indices = @transform_8, window_bounds = array<i64: 1, 128>}, {pipeline_mode = #tpu.pipeline_mode<synchronous>, transform_indices = @transform_9, window_bounds = array<i64: 128, 128>}, {pipeline_mode = #tpu.pipeline_mode<synchronous>, transform_indices = @transform_10, window_bounds = array<i64: 1, 128>}, {transform_indices = @transform_11, window_bounds = array<i64: 2, 8, 128>}]} {
    %c0 = arith.constant 0 : index
    %c0_0 = arith.constant 0 : index
    %c0_1 = arith.constant 0 : index
    %0 = vector.load %arg1[%c0, %c0_0, %c0_1] : memref<2x64x256xbf16, #tpu.memory_space<vmem>>, vector<2x64x256xbf16>
    %1 = vector.shape_cast %0 : vector<2x64x256xbf16> to vector<128x256xbf16>
    %c0_2 = arith.constant 0 : index
    %c0_3 = arith.constant 0 : index
    %2 = vector.load %arg4[%c0_2, %c0_3] : memref<256x128xbf16, #tpu.memory_space<vmem>>, vector<256x128xbf16>
    %cst = arith.constant dense<0.000000e+00> : vector<128x128xf32>
    %3 = tpu.matmul %1, %2, %cst {dimension_numbers = #tpu.dot_dimension_numbers<[1], [0], [0], [1], [0, 0, 1, 1], [], []>} : vector<128x256xbf16>, vector<256x128xbf16>, vector<128x128xf32> -> vector<128x128xf32>
    %c0_4 = arith.constant 0 : index
    %c0_5 = arith.constant 0 : index
    %4 = vector.load %arg5[%c0_4, %c0_5] : memref<1x128xf32, #tpu.memory_space<vmem>>, vector<1x128xf32>
    %5 = vector.broadcast %4 : vector<1x128xf32> to vector<128x128xf32>
    %6 = arith.addf %3, %5 : vector<128x128xf32>
    %cst_6 = arith.constant 0.000000e+00 : f32
    %7 = vector.broadcast %cst_6 : f32 to vector<128x128xf32>
    %8 = arith.maximumf %6, %7 : vector<128x128xf32>
    %9 = arith.truncf %8 : vector<128x128xf32> to vector<128x128xbf16>
    %c0_7 = arith.constant 0 : index
    %c0_8 = arith.constant 0 : index
    %10 = vector.load %arg6[%c0_7, %c0_8] : memref<128x128xbf16, #tpu.memory_space<vmem>>, vector<128x128xbf16>
    %cst_9 = arith.constant dense<0.000000e+00> : vector<128x128xf32>
    %11 = tpu.matmul %9, %10, %cst_9 {dimension_numbers = #tpu.dot_dimension_numbers<[1], [0], [0], [1], [0, 0, 1, 1], [], []>} : vector<128x128xbf16>, vector<128x128xbf16>, vector<128x128xf32> -> vector<128x128xf32>
    %c0_10 = arith.constant 0 : index
    %c0_11 = arith.constant 0 : index
    %12 = vector.load %arg7[%c0_10, %c0_11] : memref<1x128xf32, #tpu.memory_space<vmem>>, vector<1x128xf32>
    %13 = vector.broadcast %12 : vector<1x128xf32> to vector<128x128xf32>
    %14 = arith.addf %11, %13 : vector<128x128xf32>
    %cst_12 = arith.constant 0.000000e+00 : f32
    %15 = vector.broadcast %cst_12 : f32 to vector<128x128xf32>
    %16 = arith.maximumf %14, %15 : vector<128x128xf32>
    %17 = arith.truncf %16 : vector<128x128xf32> to vector<128x128xbf16>
    %c0_13 = arith.constant 0 : index
    %c0_14 = arith.constant 0 : index
    %18 = vector.load %arg3[%c0_13, %c0_14] : memref<1x64xi32, #tpu.memory_space<vmem>>, vector<1x64xi32>
    %19 = tpu.iota {dimensions = array<i32: 0>} : vector<8x64xi32>
    %20 = vector.broadcast %18 : vector<1x64xi32> to vector<8x64xi32>
    %21 = arith.cmpi eq, %19, %20 : vector<8x64xi32>
    %22 = arith.extui %21 : vector<8x64xi1> to vector<8x64xi32>
    %23 = arith.sitofp %22 : vector<8x64xi32> to vector<8x64xf32>
    %24 = arith.truncf %23 : vector<8x64xf32> to vector<8x64xbf16>
    %25 = vector.extract_strided_slice %17 {offsets = [0, 0], sizes = [64, 128], strides = [1, 1]} : vector<128x128xbf16> to vector<64x128xbf16>
    %cst_15 = arith.constant dense<0.000000e+00> : vector<8x128xf32>
    %26 = tpu.matmul %24, %25, %cst_15 {dimension_numbers = #tpu.dot_dimension_numbers<[1], [0], [0], [1], [0, 0, 1, 1], [], []>} : vector<8x64xbf16>, vector<64x128xbf16>, vector<8x128xf32> -> vector<8x128xf32>
    %27 = vector.extract_strided_slice %17 {offsets = [64, 0], sizes = [64, 128], strides = [1, 1]} : vector<128x128xbf16> to vector<64x128xbf16>
    %cst_16 = arith.constant dense<0.000000e+00> : vector<8x128xf32>
    %28 = tpu.matmul %24, %27, %cst_16 {dimension_numbers = #tpu.dot_dimension_numbers<[1], [0], [0], [1], [0, 0, 1, 1], [], []>} : vector<8x64xbf16>, vector<64x128xbf16>, vector<8x128xf32> -> vector<8x128xf32>
    %29 = tpu.concatenate %26, %28 in 0 : vector<8x128xf32>, vector<8x128xf32> -> vector<16x128xf32>
    %c0_17 = arith.constant 0 : index
    %c0_18 = arith.constant 0 : index
    %c0_19 = arith.constant 0 : index
    %30 = vector.load %arg2[%c0_17, %c0_18, %c0_19] : memref<2x8x128xf32, #tpu.memory_space<vmem>>, vector<2x8x128xf32>
    %31 = vector.shape_cast %30 : vector<2x8x128xf32> to vector<16x128xf32>
    %32 = arith.truncf %31 : vector<16x128xf32> to vector<16x128xbf16>
    %33 = arith.truncf %29 : vector<16x128xf32> to vector<16x128xbf16>
    %34 = tpu.concatenate %32, %33 in 1 : vector<16x128xbf16>, vector<16x128xbf16> -> vector<16x256xbf16>
    %c0_20 = arith.constant 0 : index
    %c0_21 = arith.constant 0 : index
    %35 = vector.load %arg8[%c0_20, %c0_21] : memref<256x128xbf16, #tpu.memory_space<vmem>>, vector<256x128xbf16>
    %cst_22 = arith.constant dense<0.000000e+00> : vector<16x128xf32>
    %36 = tpu.matmul %34, %35, %cst_22 {dimension_numbers = #tpu.dot_dimension_numbers<[1], [0], [0], [1], [0, 0, 1, 1], [], []>} : vector<16x256xbf16>, vector<256x128xbf16>, vector<16x128xf32> -> vector<16x128xf32>
    %c0_23 = arith.constant 0 : index
    %c0_24 = arith.constant 0 : index
    %37 = vector.load %arg9[%c0_23, %c0_24] : memref<1x128xf32, #tpu.memory_space<vmem>>, vector<1x128xf32>
    %38 = vector.broadcast %37 : vector<1x128xf32> to vector<16x128xf32>
    %39 = arith.addf %36, %38 : vector<16x128xf32>
    %cst_25 = arith.constant 0.000000e+00 : f32
    %40 = vector.broadcast %cst_25 : f32 to vector<16x128xf32>
    %41 = arith.maximumf %39, %40 : vector<16x128xf32>
    %42 = arith.truncf %41 : vector<16x128xf32> to vector<16x128xbf16>
    %c0_26 = arith.constant 0 : index
    %c0_27 = arith.constant 0 : index
    %43 = vector.load %arg10[%c0_26, %c0_27] : memref<128x128xbf16, #tpu.memory_space<vmem>>, vector<128x128xbf16>
    %cst_28 = arith.constant dense<0.000000e+00> : vector<16x128xf32>
    %44 = tpu.matmul %42, %43, %cst_28 {dimension_numbers = #tpu.dot_dimension_numbers<[1], [0], [0], [1], [0, 0, 1, 1], [], []>} : vector<16x128xbf16>, vector<128x128xbf16>, vector<16x128xf32> -> vector<16x128xf32>
    %c0_29 = arith.constant 0 : index
    %c0_30 = arith.constant 0 : index
    %45 = vector.load %arg11[%c0_29, %c0_30] : memref<1x128xf32, #tpu.memory_space<vmem>>, vector<1x128xf32>
    %46 = vector.broadcast %45 : vector<1x128xf32> to vector<16x128xf32>
    %47 = arith.addf %44, %46 : vector<16x128xf32>
    %48 = arith.addf %47, %31 : vector<16x128xf32>
    %49 = vector.shape_cast %48 : vector<16x128xf32> to vector<2x8x128xf32>
    %c0_31 = arith.constant 0 : index
    %c0_32 = arith.constant 0 : index
    %c0_33 = arith.constant 0 : index
    %50 = vector.load %arg12[%c0_31, %c0_32, %c0_33] : memref<2x8x128xf32, #tpu.memory_space<vmem>>, vector<2x8x128xf32>
    tpu.vector_store %arg12[%c0_31, %c0_32, %c0_33], %49 {strides = array<i32>} : memref<2x8x128xf32, #tpu.memory_space<vmem>>, vector<2x8x128xf32>,
    return
  }
  func.func @transform_0(%arg0: i32) -> (i32, i32, i32) {
    %c0_i32 = arith.constant 0 : i32
    %c0_i32_0 = arith.constant 0 : i32
    %c0_i32_1 = arith.constant 0 : i32
    return %arg0, %c0_i32, %c0_i32_0 : i32, i32, i32
  }
  func.func @transform_1(%arg0: i32) -> (i32, i32, i32) {
    %c0_i32 = arith.constant 0 : i32
    %c0_i32_0 = arith.constant 0 : i32
    %c0_i32_1 = arith.constant 0 : i32
    return %arg0, %c0_i32, %c0_i32_0 : i32, i32, i32
  }
  func.func @transform_2(%arg0: i32) -> (i32, i32) {
    %c0_i32 = arith.constant 0 : i32
    %c0_i32_0 = arith.constant 0 : i32
    %c0_i32_1 = arith.constant 0 : i32
    return %c0_i32, %c0_i32_0 : i32, i32
  }
  func.func @transform_3(%arg0: i32) -> (i32, i32) {
    %c0_i32 = arith.constant 0 : i32
    %c0_i32_0 = arith.constant 0 : i32
    %c0_i32_1 = arith.constant 0 : i32
    return %c0_i32, %c0_i32_0 : i32, i32
  }
  func.func @transform_4(%arg0: i32) -> (i32, i32) {
    %c0_i32 = arith.constant 0 : i32
    %c0_i32_0 = arith.constant 0 : i32
    %c0_i32_1 = arith.constant 0 : i32
    return %c0_i32, %c0_i32_0 : i32, i32
  }
  func.func @transform_5(%arg0: i32) -> (i32, i32) {
    %c0_i32 = arith.constant 0 : i32
    %c0_i32_0 = arith.constant 0 : i32
    %c0_i32_1 = arith.constant 0 : i32
    return %c0_i32, %c0_i32_0 : i32, i32
  }
  func.func @transform_6(%arg0: i32) -> (i32, i32) {
    %c0_i32 = arith.constant 0 : i32
    %c0_i32_0 = arith.constant 0 : i32
    %c0_i32_1 = arith.constant 0 : i32
    return %c0_i32, %c0_i32_0 : i32, i32
  }
  func.func @transform_7(%arg0: i32) -> (i32, i32) {
    %c0_i32 = arith.constant 0 : i32
    %c0_i32_0 = arith.constant 0 : i32
    %c0_i32_1 = arith.constant 0 : i32
    return %c0_i32, %c0_i32_0 : i32, i32
  }
  func.func @transform_8(%arg0: i32) -> (i32, i32) {
    %c0_i32 = arith.constant 0 : i32
    %c0_i32_0 = arith.constant 0 : i32
    %c0_i32_1 = arith.constant 0 : i32
    return %c0_i32, %c0_i32_0 : i32, i32
  }
  func.func @transform_9(%arg0: i32) -> (i32, i32) {
    %c0_i32 = arith.constant 0 : i32
    %c0_i32_0 = arith.constant 0 : i32
    %c0_i32_1 = arith.constant 0 : i32
    return %c0_i32, %c0_i32_0 : i32, i32
  }
  func.func @transform_10(%arg0: i32) -> (i32, i32) {
    %c0_i32 = arith.constant 0 : i32
    %c0_i32_0 = arith.constant 0 : i32
    %c0_i32_1 = arith.constant 0 : i32
    return %c0_i32, %c0_i32_0 : i32, i32
  }
  func.func @transform_11(%arg0: i32) -> (i32, i32, i32) {
    %c0_i32 = arith.constant 0 : i32
    %c0_i32_0 = arith.constant 0 : i32
    %c0_i32_1 = arith.constant 0 : i32
    return %arg0, %c0_i32, %c0_i32_0 : i32, i32, i32
  }
}

</mosaic_0001>

<llo_original>
// kernel: tpu_custom_call.1
$region0: #{tpu_custom_call.1}
  #allocation0 [shape = 'u32[]', space=smem, size = 0x4, offset = 0x4, fixed_abs, tag = 'smem constant byte address 0x4 - core index']
  #allocation1 [shape = 'u32[144,128]{1,0:T(1,128)}', space=vmem, size = 0x12000, scoped, tag = 'internal scratch']
  %s0 = inlined_call_operand.hbm [shape: bf16[4,64,256], index: 0, kind: input, shape index: {}]
  %s1 = inlined_call_operand.hbm [shape: f32[4,8,128], index: 1, kind: input, shape index: {}]
  %s2 = inlined_call_operand.vmem [shape: s32[1,64], index: 2, kind: input, shape index: {}]
  %s3 = inlined_call_operand.hbm [shape: bf16[256,128], index: 3, kind: input, shape index: {}]
  %s4 = inlined_call_operand.vmem [shape: f32[1,128], index: 4, kind: input, shape index: {}]
  %s5 = inlined_call_operand.hbm [shape: bf16[128,128], index: 5, kind: input, shape index: {}]
  %s6 = inlined_call_operand.vmem [shape: f32[1,128], index: 6, kind: input, shape index: {}]
  %s7 = inlined_call_operand.hbm [shape: bf16[256,128], index: 7, kind: input, shape index: {}]
  %s8 = inlined_call_operand.vmem [shape: f32[1,128], index: 8, kind: input, shape index: {}]
  %s9 = inlined_call_operand.hbm [shape: bf16[128,128], index: 9, kind: input, shape index: {}]
  %s10 = inlined_call_operand.vmem [shape: f32[1,128], index: 10, kind: input, shape index: {}]
  %s11 = inlined_call_operand.hbm [shape: f32[4,8,128], index: 11, kind: output, shape index: {}]
  %s12 = sld [smem:[#allocation0]]
  $region101: #{tpu_custom_call.1} parent=0
    _
  %s14 = ssub.s32 1, %s12
  %s15 = scalar_select 0, %s14, %s12
  $region1: #{tpu_custom_call.1} parent=0
    #allocation2 [shape = 'u8[131072]{0}', space=vmem, size = 0x20000, scoped, tag = 'input window, operand 0']
    #allocation3 [shape = 's32[2]{0}', space=sflag, size = 0x8, scoped, tag = 'scoped memory for tpu_custom_call.1']
    #allocation4 [shape = 's32[2]{0}', space=sflag, size = 0x8, scoped, tag = 'scoped memory for tpu_custom_call.1']
    #allocation5 [shape = 'u8[16384]{0}', space=vmem, size = 0x4000, scoped, tag = 'input window, operand 1']
    #allocation6 [shape = 's32[2]{0}', space=sflag, size = 0x8, scoped, tag = 'scoped memory for tpu_custom_call.1']
    #allocation7 [shape = 'u8[65536]{0}', space=vmem, size = 0x10000, scoped, tag = 'input window, operand 3, single buffered']
    #allocation8 [shape = 'u8[32768]{0}', space=vmem, size = 0x8000, scoped, tag = 'input window, operand 5, single buffered']
    #allocation9 [shape = 's32[1]{0}', space=sflag, size = 0x4, scoped, tag = 'scoped memory for tpu_custom_call.1']
    #allocation10 [shape = 'u8[65536]{0}', space=vmem, size = 0x10000, scoped, tag = 'input window, operand 7, single buffered']
    #allocation11 [shape = 'u8[32768]{0}', space=vmem, size = 0x8000, scoped, tag = 'input window, operand 9, single buffered']
    #allocation12 [shape = 's32[1]{0}', space=sflag, size = 0x4, scoped, tag = 'scoped memory for tpu_custom_call.1']
    #allocation13 [shape = 'u8[16384]{0}', space=vmem, size = 0x4000, scoped, tag = 'output window, operand 0']
    %16 = vsyncpa [#allocation3], 0
    %s17 = scalar_lea.sflag [#allocation3], 1
    %18 = vsyncpa %s17, 0
    %19 = vsyncpa [#allocation6], 0
    %s20 = scalar_lea.sflag [#allocation6], 1
    %21 = vsyncpa %s20, 0
    %22 = vsyncpa [#allocation9], 0
    %23 = vsyncpa [#allocation12], 0
    %24 = vsyncpa [#allocation4], 0
    %s25 = scalar_lea.sflag [#allocation4], 1
    %26 = vsyncpa %s25, 0
    loop: start=0, step=1, limit=4
    $region2: #{tpu_custom_call.1} parent=1 // loop_pre_header
      _
    $region3: #{tpu_custom_call.1} parent=1 // loop_header
      %s28 = sphi 0, %s32
      %p29 = scmp.ge.s32.totalorder %s28, 4
      %s38 = sphi 0, %s40
      %s41 = sphi 0, %s38
      %s42 = sphi 0, %s41
      %s58 = sphi 0, %s42
      %s64 = sphi 0, %s66
      %s67 = sphi 0, %s64
      %s68 = sphi 0, %s67
      %s84 = sphi 0, %s68
      %s88 = sphi 0, %s88
      %s90 = sphi 0, %s88
      %s91 = sphi 0, %s90
      %s105 = sphi 0, %s91
      %s109 = sphi 0, %s109
      %s111 = sphi 0, %s109
      %s112 = sphi 0, %s111
      %s126 = sphi 0, %s112
      %s130 = sphi 0, %s130
      %s132 = sphi 0, %s130
      %s133 = sphi 0, %s132
      %s147 = sphi 0, %s133
      %s151 = sphi 0, %s151
      %s153 = sphi 0, %s151
      %s154 = sphi 0, %s153
      %s168 = sphi 0, %s154
      %s172 = sphi 0, %s172
      %s174 = sphi 0, %s172
      %s175 = sphi 0, %s174
      %s189 = sphi 0, %s175
      %s193 = sphi 0, %s193
      %s195 = sphi 0, %s193
      %s196 = sphi 0, %s195
      %s210 = sphi 0, %s196
      %s214 = sphi 0, %s214
      %s216 = sphi 0, %s214
      %s217 = sphi 0, %s216
      %s231 = sphi 0, %s217
      %s235 = sphi 0, %s235
      %s237 = sphi 0, %s235
      %s238 = sphi 0, %s237
      %s252 = sphi 0, %s238
      %s256 = sphi 0, %s256
      %s258 = sphi 0, %s256
      %s259 = sphi 0, %s258
      %s273 = sphi 0, %s259
      %s279 = sphi 0, %s281
      %s282 = sphi 0, %s279
      %s283 = sphi 0, %s282
      %s299 = sphi 0, %s283
    $region4: #{tpu_custom_call.1} parent=1 // loop_header_branch
      %31 = sbr.rel (%p29) target = $region8
    $region5: #{tpu_custom_call.1} parent=1 // loop_body
      %s33 = ssub.s32 %s28, 1
      %s34 = ssub.s32 %s28, 2
      %s35 = sadd.s32 %s28, 1
      %s36 = ssub.s32 %s28, %s35
      %p37 = scmp.eq.s32.totalorder %s36, 0
      %s39 = sadd.s32 %s38, 1
      %s40 = scalar_select %p37, %s38, %s39
      %p43 = pneg %p37
      %p44 = scmp.eq.s32.totalorder %s28, 1
      %p45 = por %p43, %p44
      %p46 = scmp.ne.s32.totalorder %s38, %s41
      %p47 = scmp.eq.s32.totalorder %s28, 0
      %p48 = por %p46, %p47
      %p49 = scmp.ne.s32.totalorder %s38, %s41
      %p50 = scmp.eq.s32.totalorder %s33, 1
      %p51 = por %p49, %p50
      %p52 = scmp.ne.s32.totalorder %s41, %s42
      %p53 = scmp.eq.s32.totalorder %s33, 0
      %p54 = por %p52, %p53
      %p55 = scmp.ne.s32.totalorder %s41, %s42
      %p56 = scmp.eq.s32.totalorder %s34, 1
      %p57 = por %p55, %p56
      %p59 = scmp.ne.s32.totalorder %s42, %s58
      %p60 = scmp.eq.s32.totalorder %s34, 0
      %p61 = por %p59, %p60
      %s62 = ssub.s32 %s28, %s35
      %p63 = scmp.eq.s32.totalorder %s62, 0
      %s65 = sadd.s32 %s64, 1
      %s66 = scalar_select %p63, %s64, %s65
      %p69 = pneg %p63
      %p70 = scmp.eq.s32.totalorder %s28, 1
      %p71 = por %p69, %p70
      %p72 = scmp.ne.s32.totalorder %s64, %s67
      %p73 = scmp.eq.s32.totalorder %s28, 0
      %p74 = por %p72, %p73
      %p75 = scmp.ne.s32.totalorder %s64, %s67
      %p76 = scmp.eq.s32.totalorder %s33, 1
      %p77 = por %p75, %p76
      %p78 = scmp.ne.s32.totalorder %s67, %s68
      %p79 = scmp.eq.s32.totalorder %s33, 0
      %p80 = por %p78, %p79
      %p81 = scmp.ne.s32.totalorder %s67, %s68
      %p82 = scmp.eq.s32.totalorder %s34, 1
      %p83 = por %p81, %p82
      %p85 = scmp.ne.s32.totalorder %s68, %s84
      %p86 = scmp.eq.s32.totalorder %s34, 0
      %p87 = por %p85, %p86
      %s89 = sadd.s32 %s88, 1
      %p92 = scmp.eq.s32.totalorder %s28, 1
      %p93 = scmp.ne.s32.totalorder %s88, %s90
      %p94 = scmp.eq.s32.totalorder %s28, 0
      %p95 = por %p93, %p94
      %p96 = scmp.ne.s32.totalorder %s88, %s90
      %p97 = scmp.eq.s32.totalorder %s33, 1
      %p98 = por %p96, %p97
      %p99 = scmp.ne.s32.totalorder %s90, %s91
      %p100 = scmp.eq.s32.totalorder %s33, 0
      %p101 = por %p99, %p100
      %p102 = scmp.ne.s32.totalorder %s90, %s91
      %p103 = scmp.eq.s32.totalorder %s34, 1
      %p104 = por %p102, %p103
      %p106 = scmp.ne.s32.totalorder %s91, %s105
      %p107 = scmp.eq.s32.totalorder %s34, 0
      %p108 = por %p106, %p107
      %s110 = sadd.s32 %s109, 1
      %p113 = scmp.eq.s32.totalorder %s28, 1
      %p114 = scmp.ne.s32.totalorder %s109, %s111
      %p115 = scmp.eq.s32.totalorder %s28, 0
      %p116 = por %p114, %p115
      %p117 = scmp.ne.s32.totalorder %s109, %s111
      %p118 = scmp.eq.s32.totalorder %s33, 1
      %p119 = por %p117, %p118
      %p120 = scmp.ne.s32.totalorder %s111, %s112
      %p121 = scmp.eq.s32.totalorder %s33, 0
      %p122 = por %p120, %p121
      %p123 = scmp.ne.s32.totalorder %s111, %s112
      %p124 = scmp.eq.s32.totalorder %s34, 1
      %p125 = por %p123, %p124
      %p127 = scmp.ne.s32.totalorder %s112, %s126
      %p128 = scmp.eq.s32.totalorder %s34, 0
      %p129 = por %p127, %p128
      %s131 = sadd.s32 %s130, 1
      %p134 = scmp.eq.s32.totalorder %s28, 1
      %p135 = scmp.ne.s32.totalorder %s130, %s132
      %p136 = scmp.eq.s32.totalorder %s28, 0
      %p137 = por %p135, %p136
      %p138 = scmp.ne.s32.totalorder %s130, %s132
      %p139 = scmp.eq.s32.totalorder %s33, 1
      %p140 = por %p138, %p139
      %p141 = scmp.ne.s32.totalorder %s132, %s133
      %p142 = scmp.eq.s32.totalorder %s33, 0
      %p143 = por %p141, %p142
      %p144 = scmp.ne.s32.totalorder %s132, %s133
      %p145 = scmp.eq.s32.totalorder %s34, 1
      %p146 = por %p144, %p145
      %p148 = scmp.ne.s32.totalorder %s133, %s147
      %p149 = scmp.eq.s32.totalorder %s34, 0
      %p150 = por %p148, %p149
      %s152 = sadd.s32 %s151, 1
      %p155 = scmp.eq.s32.totalorder %s28, 1
      %p156 = scmp.ne.s32.totalorder %s151, %s153
      %p157 = scmp.eq.s32.totalorder %s28, 0
      %p158 = por %p156, %p157
      %p159 = scmp.ne.s32.totalorder %s151, %s153
      %p160 = scmp.eq.s32.totalorder %s33, 1
      %p161 = por %p159, %p160
      %p162 = scmp.ne.s32.totalorder %s153, %s154
      %p163 = scmp.eq.s32.totalorder %s33, 0
      %p164 = por %p162, %p163
      %p165 = scmp.ne.s32.totalorder %s153, %s154
      %p166 = scmp.eq.s32.totalorder %s34, 1
      %p167 = por %p165, %p166
      %p169 = scmp.ne.s32.totalorder %s154, %s168
      %p170 = scmp.eq.s32.totalorder %s34, 0
      %p171 = por %p169, %p170
      %s173 = sadd.s32 %s172, 1
      %p176 = scmp.eq.s32.totalorder %s28, 1
      %p177 = scmp.ne.s32.totalorder %s172, %s174
      %p178 = scmp.eq.s32.totalorder %s28, 0
      %p179 = por %p177, %p178
      %p180 = scmp.ne.s32.totalorder %s172, %s174
      %p181 = scmp.eq.s32.totalorder %s33, 1
      %p182 = por %p180, %p181
      %p183 = scmp.ne.s32.totalorder %s174, %s175
      %p184 = scmp.eq.s32.totalorder %s33, 0
      %p185 = por %p183, %p184
      %p186 = scmp.ne.s32.totalorder %s174, %s175
      %p187 = scmp.eq.s32.totalorder %s34, 1
      %p188 = por %p186, %p187
      %p190 = scmp.ne.s32.totalorder %s175, %s189
      %p191 = scmp.eq.s32.totalorder %s34, 0
      %p192 = por %p190, %p191
      %s194 = sadd.s32 %s193, 1
      %p197 = scmp.eq.s32.totalorder %s28, 1
      %p198 = scmp.ne.s32.totalorder %s193, %s195
      %p199 = scmp.eq.s32.totalorder %s28, 0
      %p200 = por %p198, %p199
      %p201 = scmp.ne.s32.totalorder %s193, %s195
      %p202 = scmp.eq.s32.totalorder %s33, 1
      %p203 = por %p201, %p202
      %p204 = scmp.ne.s32.totalorder %s195, %s196
      %p205 = scmp.eq.s32.totalorder %s33, 0
      %p206 = por %p204, %p205
      %p207 = scmp.ne.s32.totalorder %s195, %s196
      %p208 = scmp.eq.s32.totalorder %s34, 1
      %p209 = por %p207, %p208
      %p211 = scmp.ne.s32.totalorder %s196, %s210
      %p212 = scmp.eq.s32.totalorder %s34, 0
      %p213 = por %p211, %p212
      %s215 = sadd.s32 %s214, 1
      %p218 = scmp.eq.s32.totalorder %s28, 1
      %p219 = scmp.ne.s32.totalorder %s214, %s216
      %p220 = scmp.eq.s32.totalorder %s28, 0
      %p221 = por %p219, %p220
      %p222 = scmp.ne.s32.totalorder %s214, %s216
      %p223 = scmp.eq.s32.totalorder %s33, 1
      %p224 = por %p222, %p223
      %p225 = scmp.ne.s32.totalorder %s216, %s217
      %p226 = scmp.eq.s32.totalorder %s33, 0
      %p227 = por %p225, %p226
      %p228 = scmp.ne.s32.totalorder %s216, %s217
      %p229 = scmp.eq.s32.totalorder %s34, 1
      %p230 = por %p228, %p229
      %p232 = scmp.ne.s32.totalorder %s217, %s231
      %p233 = scmp.eq.s32.totalorder %s34, 0
      %p234 = por %p232, %p233
      %s236 = sadd.s32 %s235, 1
      %p239 = scmp.eq.s32.totalorder %s28, 1
      %p240 = scmp.ne.s32.totalorder %s235, %s237
      %p241 = scmp.eq.s32.totalorder %s28, 0
      %p242 = por %p240, %p241
      %p243 = scmp.ne.s32.totalorder %s235, %s237
      %p244 = scmp.eq.s32.totalorder %s33, 1
      %p245 = por %p243, %p244
      %p246 = scmp.ne.s32.totalorder %s237, %s238
      %p247 = scmp.eq.s32.totalorder %s33, 0
      %p248 = por %p246, %p247
      %p249 = scmp.ne.s32.totalorder %s237, %s238
      %p250 = scmp.eq.s32.totalorder %s34, 1
      %p251 = por %p249, %p250
      %p253 = scmp.ne.s32.totalorder %s238, %s252
      %p254 = scmp.eq.s32.totalorder %s34, 0
      %p255 = por %p253, %p254
      %s257 = sadd.s32 %s256, 1
      %p260 = scmp.eq.s32.totalorder %s28, 1
      %p261 = scmp.ne.s32.totalorder %s256, %s258
      %p262 = scmp.eq.s32.totalorder %s28, 0
      %p263 = por %p261, %p262
      %p264 = scmp.ne.s32.totalorder %s256, %s258
      %p265 = scmp.eq.s32.totalorder %s33, 1
      %p266 = por %p264, %p265
      %p267 = scmp.ne.s32.totalorder %s258, %s259
      %p268 = scmp.eq.s32.totalorder %s33, 0
      %p269 = por %p267, %p268
      %p270 = scmp.ne.s32.totalorder %s258, %s259
      %p271 = scmp.eq.s32.totalorder %s34, 1
      %p272 = por %p270, %p271
      %p274 = scmp.ne.s32.totalorder %s259, %s273
      %p275 = scmp.eq.s32.totalorder %s34, 0
      %p276 = por %p274, %p275
      %s277 = ssub.s32 %s28, %s35
      %p278 = scmp.eq.s32.totalorder %s277, 0
      %s280 = sadd.s32 %s279, 1
      %s281 = scalar_select %p278, %s279, %s280
      %p284 = pneg %p278
      %p285 = scmp.eq.s32.totalorder %s28, 1
      %p286 = por %p284, %p285
      %p287 = scmp.ne.s32.totalorder %s279, %s282
      %p288 = scmp.eq.s32.totalorder %s28, 0
      %p289 = por %p287, %p288
      %p290 = scmp.ne.s32.totalorder %s279, %s282
      %p291 = scmp.eq.s32.totalorder %s33, 1
      %p292 = por %p290, %p291
      %p293 = scmp.ne.s32.totalorder %s282, %s283
      %p294 = scmp.eq.s32.totalorder %s33, 0
      %p295 = por %p293, %p294
      %p296 = scmp.ne.s32.totalorder %s282, %s283
      %p297 = scmp.eq.s32.totalorder %s34, 1
      %p298 = por %p296, %p297
      %p300 = scmp.ne.s32.totalorder %s283, %s299
      %p301 = scmp.eq.s32.totalorder %s34, 0
      %p302 = por %p300, %p301
      %p303 = scmp.le.s32.totalorder 1, %s28
      %p304 = scmp.lt.s32.totalorder %s28, 3
      %p305 = pnand %p303, %p304
      %p306 = pneg %p305
      // Predicated region
      $region9: #{tpu_custom_call.1} parent=5 // pred_check
        _
      $region10: #{tpu_custom_call.1} parent=5 // pred_check_branch
        %308 = sbr.rel (%p305) target = $region12
      $region11: #{tpu_custom_call.1} parent=5 // pred_region
        %s309 = ssub.s32 %s28, 1
        // Predicated region
        $region13: #{tpu_custom_call.1} parent=11 // pred_check
          %p310 = pneg %p101
        $region14: #{tpu_custom_call.1} parent=11 // pred_check_branch
          %312 = sbr.rel (%p310) target = $region16
        $region15: #{tpu_custom_call.1} parent=11 // pred_region
          _
        $region16: #{tpu_custom_call.1} parent=11 // pred_fallthru
          _
        // Predicated region
        $region17: #{tpu_custom_call.1} parent=11 // pred_check
          %p313 = pneg %p122
        $region18: #{tpu_custom_call.1} parent=11 // pred_check_branch
          %315 = sbr.rel (%p313) target = $region20
        $region19: #{tpu_custom_call.1} parent=11 // pred_region
          %s317 = ssub.s32 2048, 2048
          %318 = vsyncadd [#allocation6], %s317
          %s319 = sshll.u32 [#allocation7], 4
          %s320 = int_to_ptr.vmem [resolvable:$true] %s319
          %325 = dma.hbm_to_vmem [thread:$0]  %s3, 2048, %s320, [#allocation6], 64, 64, 4
        $region20: #{tpu_custom_call.1} parent=11 // pred_fallthru
          _
        // Predicated region
        $region21: #{tpu_custom_call.1} parent=11 // pred_check
          %p326 = pneg %p143
        $region22: #{tpu_custom_call.1} parent=11 // pred_check_branch
          %328 = sbr.rel (%p326) target = $region24
        $region23: #{tpu_custom_call.1} parent=11 // pred_region
          _
        $region24: #{tpu_custom_call.1} parent=11 // pred_fallthru
          _
        // Predicated region
        $region25: #{tpu_custom_call.1} parent=11 // pred_check
          %p329 = pneg %p164
        $region26: #{tpu_custom_call.1} parent=11 // pred_check_branch
          %331 = sbr.rel (%p329) target = $region28
        $region27: #{tpu_custom_call.1} parent=11 // pred_region
          %s333 = ssub.s32 1024, 1024
          %334 = vsyncadd [#allocation9], %s333
          %s335 = sshll.u32 [#allocation8], 4
          %s336 = int_to_ptr.vmem [resolvable:$true] %s335
          %341 = dma.hbm_to_vmem [thread:$0]  %s5, 1024, %s336, [#allocation9], 64, 64, 4
        $region28: #{tpu_custom_call.1} parent=11 // pred_fallthru
          _
        // Predicated region
        $region29: #{tpu_custom_call.1} parent=11 // pred_check
          %p342 = pneg %p185
        $region30: #{tpu_custom_call.1} parent=11 // pred_check_branch
          %344 = sbr.rel (%p342) target = $region32
        $region31: #{tpu_custom_call.1} parent=11 // pred_region
          _
        $region32: #{tpu_custom_call.1} parent=11 // pred_fallthru
          _
        // Predicated region
        $region33: #{tpu_custom_call.1} parent=11 // pred_check
          %p345 = pneg %p206
        $region34: #{tpu_custom_call.1} parent=11 // pred_check_branch
          %347 = sbr.rel (%p345) target = $region36
        $region35: #{tpu_custom_call.1} parent=11 // pred_region
          %s349 = ssub.s32 2048, 2048
          %350 = vsyncadd [#allocation9], %s349
          %s351 = sshll.u32 [#allocation10], 4
          %s352 = int_to_ptr.vmem [resolvable:$true] %s351
          %357 = dma.hbm_to_vmem [thread:$0]  %s7, 2048, %s352, [#allocation9], 64, 64, 4
        $region36: #{tpu_custom_call.1} parent=11 // pred_fallthru
          _
        // Predicated region
        $region37: #{tpu_custom_call.1} parent=11 // pred_check
          %p358 = pneg %p227
        $region38: #{tpu_custom_call.1} parent=11 // pred_check_branch
          %360 = sbr.rel (%p358) target = $region40
        $region39: #{tpu_custom_call.1} parent=11 // pred_region
          _
        $region40: #{tpu_custom_call.1} parent=11 // pred_fallthru
          _
        // Predicated region
        $region41: #{tpu_custom_call.1} parent=11 // pred_check
          %p361 = pneg %p248
        $region42: #{tpu_custom_call.1} parent=11 // pred_check_branch
          %363 = sbr.rel (%p361) target = $region44
        $region43: #{tpu_custom_call.1} parent=11 // pred_region
          %s365 = ssub.s32 1024, 1024
          %366 = vsyncadd [#allocation12], %s365
          %s367 = sshll.u32 [#allocation11], 4
          %s368 = int_to_ptr.vmem [resolvable:$true] %s367
          %373 = dma.hbm_to_vmem [thread:$0]  %s9, 1024, %s368, [#allocation12], 64, 64, 4
        $region44: #{tpu_custom_call.1} parent=11 // pred_fallthru
          _
        // Predicated region
        $region45: #{tpu_custom_call.1} parent=11 // pred_check
          %p374 = pneg %p269
        $region46: #{tpu_custom_call.1} parent=11 // pred_check_branch
          %376 = sbr.rel (%p374) target = $region48
        $region47: #{tpu_custom_call.1} parent=11 // pred_region
          _
        $region48: #{tpu_custom_call.1} parent=11 // pred_fallthru
          _
      $region12: #{tpu_custom_call.1} parent=5 // pred_fallthru
        _
      %p377 = scmp.lt.s32.totalorder %s28, 2
      // Predicated region
      $region49: #{tpu_custom_call.1} parent=5 // pred_check
        %p378 = pneg %p377
      $region50: #{tpu_custom_call.1} parent=5 // pred_check_branch
        %380 = sbr.rel (%p378) target = $region52
      $region51: #{tpu_custom_call.1} parent=5 // pred_region
        // Predicated region
        $region53: #{tpu_custom_call.1} parent=51 // pred_check
          %p381 = pneg %p48
        $region54: #{tpu_custom_call.1} parent=51 // pred_check_branch
          %383 = sbr.rel (%p381) target = $region56
        $region55: #{tpu_custom_call.1} parent=51 // pred_region
          %s384 = sand.u32 %s38, 1
          %s385 = scalar_lea.sflag [#allocation3], %s384
          %s386 = sand.u32 %s38, 1
          %s387 = smul.addr %s386, 128
          %s388 = scalar_lea.vmem [#allocation2], %s387
          %s389 = smul.u32 2, %s28
          %s391 = ssub.s32 2048, 2048
          %392 = vsyncadd %s385, %s391
          %s393 = smul.addr %s389, 16
          %s394 = smul.addr %s393, 64
          %s395 = scalar_lea.hbm %s0, %s394
          %s396 = sshll.u32 %s388, 4
          %s397 = int_to_ptr.vmem [resolvable:$true] %s396
          %402 = dma.hbm_to_vmem [thread:$0]  %s395, 2048, %s397, %s385, 128, 128, 8
        $region56: #{tpu_custom_call.1} parent=51 // pred_fallthru
          _
        // Predicated region
        $region57: #{tpu_custom_call.1} parent=51 // pred_check
          %p403 = pneg %p74
        $region58: #{tpu_custom_call.1} parent=51 // pred_check_branch
          %405 = sbr.rel (%p403) target = $region60
        $region59: #{tpu_custom_call.1} parent=51 // pred_region
          %s406 = sand.u32 %s28, 1
          %s407 = scalar_lea.sflag [#allocation6], %s406
          %s408 = sand.u32 %s64, 1
          %s409 = smul.addr %s408, 16
          %s410 = scalar_lea.vmem [#allocation5], %s409
          %s411 = smul.u32 2, %s28
          %s413 = ssub.s32 256, 256
          %414 = vsyncadd %s407, %s413
          %s415 = smul.addr %s411, 128
          %s416 = scalar_lea.hbm %s1, %s415
          %s417 = sshll.u32 %s410, 4
          %s418 = int_to_ptr.vmem [resolvable:$true] %s417
          %423 = dma.hbm_to_vmem [thread:$0]  %s416, 256, %s418, %s407, 128, 128, 8
        $region60: #{tpu_custom_call.1} parent=51 // pred_fallthru
          _
      $region52: #{tpu_custom_call.1} parent=5 // pred_fallthru
        _
      %p424 = scmp.le.s32.totalorder 1, %s28
      %p425 = scmp.lt.s32.totalorder %s28, 3
      %p426 = pnand %p424, %p425
      %p427 = pneg %p426
      // Predicated region
      $region61: #{tpu_custom_call.1} parent=5 // pred_check
        _
      $region62: #{tpu_custom_call.1} parent=5 // pred_check_branch
        %429 = sbr.rel (%p426) target = $region64
      $region63: #{tpu_custom_call.1} parent=5 // pred_region
        %s430 = ssub.s32 %s28, 1
        %s431 = sand.u32 %s41, 1
        %s432 = scalar_lea.sflag [#allocation3], %s431
        %s433 = sand.u32 %s41, 1
        %s434 = smul.addr %s433, 128
        %s435 = scalar_lea.vmem [#allocation2], %s434
        // Predicated region
        $region65: #{tpu_custom_call.1} parent=63 // pred_check
          %p436 = pneg %p54
        $region66: #{tpu_custom_call.1} parent=63 // pred_check_branch
          %438 = sbr.rel (%p436) target = $region68
        $region67: #{tpu_custom_call.1} parent=63 // pred_region
          %439 = dma.done %s432, 2048
        $region68: #{tpu_custom_call.1} parent=63 // pred_fallthru
          _
        %s440 = sand.u32 %s33, 1
        %s441 = scalar_lea.sflag [#allocation6], %s440
        %s442 = sand.u32 %s67, 1
        %s443 = smul.addr %s442, 16
        %s444 = scalar_lea.vmem [#allocation5], %s443
        // Predicated region
        $region69: #{tpu_custom_call.1} parent=63 // pred_check
          %p445 = pneg %p80
        $region70: #{tpu_custom_call.1} parent=63 // pred_check_branch
          %447 = sbr.rel (%p445) target = $region72
        $region71: #{tpu_custom_call.1} parent=63 // pred_region
          %448 = dma.done %s441, 256
        $region72: #{tpu_custom_call.1} parent=63 // pred_fallthru
          _
        // Predicated region
        $region73: #{tpu_custom_call.1} parent=63 // pred_check
          %p449 = pneg %p122
        $region74: #{tpu_custom_call.1} parent=63 // pred_check_branch
          %451 = sbr.rel (%p449) target = $region76
        $region75: #{tpu_custom_call.1} parent=63 // pred_region
          %452 = dma.done [#allocation6], 2048
        $region76: #{tpu_custom_call.1} parent=63 // pred_fallthru
          _
        // Predicated region
        $region77: #{tpu_custom_call.1} parent=63 // pred_check
          %p453 = pneg %p164
        $region78: #{tpu_custom_call.1} parent=63 // pred_check_branch
          %455 = sbr.rel (%p453) target = $region80
        $region79: #{tpu_custom_call.1} parent=63 // pred_region
          %456 = dma.done [#allocation9], 1024
        $region80: #{tpu_custom_call.1} parent=63 // pred_fallthru
          _
        // Predicated region
        $region81: #{tpu_custom_call.1} parent=63 // pred_check
          %p457 = pneg %p206
        $region82: #{tpu_custom_call.1} parent=63 // pred_check_branch
          %459 = sbr.rel (%p457) target = $region84
        $region83: #{tpu_custom_call.1} parent=63 // pred_region
          %460 = dma.done [#allocation9], 2048
        $region84: #{tpu_custom_call.1} parent=63 // pred_fallthru
          _
        // Predicated region
        $region85: #{tpu_custom_call.1} parent=63 // pred_check
          %p461 = pneg %p248
        $region86: #{tpu_custom_call.1} parent=63 // pred_check_branch
          %463 = sbr.rel (%p461) target = $region88
        $region87: #{tpu_custom_call.1} parent=63 // pred_region
          %464 = dma.done [#allocation12], 1024
        $region88: #{tpu_custom_call.1} parent=63 // pred_fallthru
          _
        %s465 = sand.u32 %s41, 1
        %s466 = scalar_lea.sflag [#allocation3], %s465
        %s467 = sand.u32 %s41, 1
        %s468 = smul.addr %s467, 128
        %s469 = scalar_lea.vmem [#allocation2], %s468
        %p470 = pneg %p54
        %p471 = pneg %p51
        %s472 = sand.u32 %s33, 1
        %s473 = scalar_lea.sflag [#allocation6], %s472
        %s474 = sand.u32 %s67, 1
        %s475 = smul.addr %s474, 16
        %s476 = scalar_lea.vmem [#allocation5], %s475
        %p477 = pneg %p80
        %p478 = pneg %p77
        %p479 = pneg %p101
        %p480 = pneg %p98
        %p481 = pneg %p122
        %p482 = pneg %p119
        %p483 = pneg %p143
        %p484 = pneg %p140
        %p485 = pneg %p164
        %p486 = pneg %p161
        %p487 = pneg %p185
        %p488 = pneg %p182
        %p489 = pneg %p206
        %p490 = pneg %p203
        %p491 = pneg %p227
        %p492 = pneg %p224
        %p493 = pneg %p248
        %p494 = pneg %p245
        %p495 = pneg %p269
        %p496 = pneg %p266
        %p497 = pneg %p295
        %p498 = pneg %p292
        %s499 = sand.u32 %s282, 1
        %s500 = scalar_lea.sflag [#allocation4], %s499
        %s501 = sand.u32 %s282, 1
        %s502 = smul.addr %s501, 16
        %s503 = scalar_lea.vmem [#allocation13], %s502
        %s504 = smul.u32 2, %s33
        %s505 = smul.u32 2, %s33
        %s506 = smul.u32 2, %s33
        %v508 = vld [vmem:[%s435] sm:$0xff]
        %v509 = vld [vmem:[%s435 + $0x8] sm:$0xff]
        %v510 = vld [vmem:[%s435 + $0x10] sm:$0xff]
        %v511 = vld [vmem:[%s435 + $0x18] sm:$0xff]
        %v512 = vld [vmem:[%s435 + $0x20] sm:$0xff]
        %v513 = vld [vmem:[%s435 + $0x28] sm:$0xff]
        %v514 = vld [vmem:[%s435 + $0x30] sm:$0xff]
        %v515 = vld [vmem:[%s435 + $0x38] sm:$0xff]
        %v516 = vld [vmem:[%s435 + $0x40] sm:$0xff]
        %v517 = vld [vmem:[%s435 + $0x48] sm:$0xff]
        %v518 = vld [vmem:[%s435 + $0x50] sm:$0xff]
        %v519 = vld [vmem:[%s435 + $0x58] sm:$0xff]
        %v520 = vld [vmem:[%s435 + $0x60] sm:$0xff]
        %v521 = vld [vmem:[%s435 + $0x68] sm:$0xff]
        %v522 = vld [vmem:[%s435 + $0x70] sm:$0xff]
        %v523 = vld [vmem:[%s435 + $0x78] sm:$0xff]
        %v524 = vld [vmem:[#allocation7] sm:$0xf]
        %v525 = vld [vmem:[#allocation7 + $0x4] sm:$0xf]
        %v526 = vld [vmem:[#allocation7 + $0x8] sm:$0xf]
        %v527 = vld [vmem:[#allocation7 + $0xc] sm:$0xf]
        %v528 = vld [vmem:[#allocation7 + $0x10] sm:$0xf]
        %v529 = vld [vmem:[#allocation7 + $0x14] sm:$0xf]
        %v530 = vld [vmem:[#allocation7 + $0x18] sm:$0xf]
        %v531 = vld [vmem:[#allocation7 + $0x1c] sm:$0xf]
        %v532 = vld [vmem:[#allocation7 + $0x20] sm:$0xf]
        %v533 = vld [vmem:[#allocation7 + $0x24] sm:$0xf]
        %v534 = vld [vmem:[#allocation7 + $0x28] sm:$0xf]
        %v535 = vld [vmem:[#allocation7 + $0x2c] sm:$0xf]
        %v536 = vld [vmem:[#allocation7 + $0x30] sm:$0xf]
        %v537 = vld [vmem:[#allocation7 + $0x34] sm:$0xf]
        %v538 = vld [vmem:[#allocation7 + $0x38] sm:$0xf]
        %v539 = vld [vmem:[#allocation7 + $0x3c] sm:$0xf]
        %v540 = vld [vmem:[#allocation7 + $0x40] sm:$0xf]
        %v541 = vld [vmem:[#allocation7 + $0x44] sm:$0xf]
        %v542 = vld [vmem:[#allocation7 + $0x48] sm:$0xf]
        %v543 = vld [vmem:[#allocation7 + $0x4c] sm:$0xf]
        %v544 = vld [vmem:[#allocation7 + $0x50] sm:$0xf]
        %v545 = vld [vmem:[#allocation7 + $0x54] sm:$0xf]
        %v546 = vld [vmem:[#allocation7 + $0x58] sm:$0xf]
        %v547 = vld [vmem:[#allocation7 + $0x5c] sm:$0xf]
        %v548 = vld [vmem:[#allocation7 + $0x60] sm:$0xf]
        %v549 = vld [vmem:[#allocation7 + $0x64] sm:$0xf]
        %v550 = vld [vmem:[#allocation7 + $0x68] sm:$0xf]
        %v551 = vld [vmem:[#allocation7 + $0x6c] sm:$0xf]
        %v552 = vld [vmem:[#allocation7 + $0x70] sm:$0xf]
        %v553 = vld [vmem:[#allocation7 + $0x74] sm:$0xf]
        %v554 = vld [vmem:[#allocation7 + $0x78] sm:$0xf]
        %v555 = vld [vmem:[#allocation7 + $0x7c] sm:$0xf]
        %v556 = vld [vmem:[%s4] sm:$0x1]
        %v558 = vlaneseq
        %v559 = vshrl.u32 %v558, 7
        %v560 = vsub.s32 0, %v559
        %v561 = vrot.slane %v556, %v560
        %v579 = vunpack.c.l.b16 %v508
        %v580 = vunpack.c.h.b16 %v508
        %v581 = vunpack.c.l.b16 %v509
        %v582 = vunpack.c.h.b16 %v509
        %v583 = vunpack.c.l.b16 %v510
        %v584 = vunpack.c.h.b16 %v510
        %v585 = vunpack.c.l.b16 %v511
        %v586 = vunpack.c.h.b16 %v511
        %v587 = vunpack.c.l.b16 %v512
        %v588 = vunpack.c.h.b16 %v512
        %v589 = vunpack.c.l.b16 %v513
        %v590 = vunpack.c.h.b16 %v513
        %v591 = vunpack.c.l.b16 %v514
        %v592 = vunpack.c.h.b16 %v514
        %v593 = vunpack.c.l.b16 %v515
        %v594 = vunpack.c.h.b16 %v515
        %v595 = vunpack.c.l.b16 %v516
        %v596 = vunpack.c.h.b16 %v516
        %v597 = vunpack.c.l.b16 %v517
        %v598 = vunpack.c.h.b16 %v517
        %v599 = vunpack.c.l.b16 %v518
        %v600 = vunpack.c.h.b16 %v518
        %v601 = vunpack.c.l.b16 %v519
        %v602 = vunpack.c.h.b16 %v519
        %v603 = vunpack.c.l.b16 %v520
        %v604 = vunpack.c.h.b16 %v520
        %v605 = vunpack.c.l.b16 %v521
        %v606 = vunpack.c.h.b16 %v521
        %v607 = vunpack.c.l.b16 %v522
        %v608 = vunpack.c.h.b16 %v522
        %v609 = vunpack.c.l.b16 %v523
        %v610 = vunpack.c.h.b16 %v523
        %v611 = vpack.c.b16 %v581, %v579
        %v612 = vpack.c.b16 %v582, %v580
        %v613 = vpack.c.b16 %v585, %v583
        %v614 = vpack.c.b16 %v586, %v584
        %v615 = vpack.c.b16 %v589, %v587
        %v616 = vpack.c.b16 %v590, %v588
        %v617 = vpack.c.b16 %v593, %v591
        %v618 = vpack.c.b16 %v594, %v592
        %v619 = vpack.c.b16 %v597, %v595
        %v620 = vpack.c.b16 %v598, %v596
        %v621 = vpack.c.b16 %v601, %v599
        %v622 = vpack.c.b16 %v602, %v600
        %v623 = vpack.c.b16 %v605, %v603
        %v624 = vpack.c.b16 %v606, %v604
        %v625 = vpack.c.b16 %v609, %v607
        %v626 = vpack.c.b16 %v610, %v608
        %v675 = vunpack.c.l.b16 %v524
        %v676 = vunpack.c.l.b16 %v525
        %v677 = vunpack.c.l.b16 %v526
        %v678 = vunpack.c.l.b16 %v527
        %v679 = vunpack.c.l.b16 %v528
        %v680 = vunpack.c.l.b16 %v529
        %v681 = vunpack.c.l.b16 %v530
        %v682 = vunpack.c.l.b16 %v531
        %v683 = vunpack.c.l.b16 %v532
        %v684 = vunpack.c.l.b16 %v533
        %v685 = vunpack.c.l.b16 %v534
        %v686 = vunpack.c.l.b16 %v535
        %v687 = vunpack.c.l.b16 %v536
        %v688 = vunpack.c.l.b16 %v537
        %v689 = vunpack.c.l.b16 %v538
        %v690 = vunpack.c.l.b16 %v539
        %v691 = vunpack.c.l.b16 %v540
        %v692 = vunpack.c.l.b16 %v541
        %v693 = vunpack.c.l.b16 %v542
        %v694 = vunpack.c.l.b16 %v543
        %v695 = vunpack.c.l.b16 %v544
        %v696 = vunpack.c.l.b16 %v545
        %v697 = vunpack.c.l.b16 %v546
        %v698 = vunpack.c.l.b16 %v547
        %v699 = vunpack.c.l.b16 %v548
        %v700 = vunpack.c.l.b16 %v549
        %v701 = vunpack.c.l.b16 %v550
        %v702 = vunpack.c.l.b16 %v551
        %v703 = vunpack.c.l.b16 %v552
        %v704 = vunpack.c.l.b16 %v553
        %v705 = vunpack.c.l.b16 %v554
        %v706 = vunpack.c.l.b16 %v555
        %v707 = vpack.c.b16 %v676, %v675
        %v708 = vpack.c.b16 %v678, %v677
        %v709 = vpack.c.b16 %v680, %v679
        %v710 = vpack.c.b16 %v682, %v681
        %v711 = vpack.c.b16 %v684, %v683
        %v712 = vpack.c.b16 %v686, %v685
        %v713 = vpack.c.b16 %v688, %v687
        %v714 = vpack.c.b16 %v690, %v689
        %v715 = vpack.c.b16 %v692, %v691
        %v716 = vpack.c.b16 %v694, %v693
        %v717 = vpack.c.b16 %v696, %v695
        %v718 = vpack.c.b16 %v698, %v697
        %v719 = vpack.c.b16 %v700, %v699
        %v720 = vpack.c.b16 %v702, %v701
        %v721 = vpack.c.b16 %v704, %v703
        %v722 = vpack.c.b16 %v706, %v705
        %739 = vmatprep.subr.bf16.mxu0 0
        %740 = vmatpush1.bf16.msra.mxu0 %v714
        %741 = vmatprep.subr.bf16.mxu0 0
        %742 = vmatpush1.bf16.msra.mxu0 %v713
        %743 = vmatprep.subr.bf16.mxu0 0
        %744 = vmatpush1.bf16.msra.mxu0 %v712
        %745 = vmatprep.subr.bf16.mxu0 0
        %746 = vmatpush1.bf16.msra.mxu0 %v711
        %747 = vmatprep.subr.bf16.mxu0 0
        %748 = vmatpush1.bf16.msra.mxu0 %v710
        %749 = vmatprep.subr.bf16.mxu0 0
        %750 = vmatpush1.bf16.msra.mxu0 %v709
        %751 = vmatprep.subr.bf16.mxu0 0
        %752 = vmatpush1.bf16.msra.mxu0 %v708
        %753 = vmatprep.subr.bf16.mxu0 0
        %754 = vmatpush1.bf16.msra.mxu0 %v707
        %755 = vmatprep.subr.bf16.mxu0 0
        %756 = vmatpush2.bf16.msra.mxu0 %v722
        %757 = vmatprep.subr.bf16.mxu0 0
        %758 = vmatpush2.bf16.msra.mxu0 %v721
        %759 = vmatprep.subr.bf16.mxu0 0
        %760 = vmatpush2.bf16.msra.mxu0 %v720
        %761 = vmatprep.subr.bf16.mxu0 0
        %762 = vmatpush2.bf16.msra.mxu0 %v719
        %763 = vmatprep.subr.bf16.mxu0 0
        %764 = vmatpush2.bf16.msra.mxu0 %v718
        %765 = vmatprep.subr.bf16.mxu0 0
        %766 = vmatpush2.bf16.msra.mxu0 %v717
        %767 = vmatprep.subr.bf16.mxu0 0
        %768 = vmatpush2.bf16.msra.mxu0 %v716
        %769 = vmatprep.subr.bf16.mxu0 0
        %770 = vmatpush2.bf16.msra.mxu0 %v715
        %771 = vmatprep.mubr.bf16.mxu0 %v612
        %772 = vmatmul.mubr.bf16.gmra.mxu0 %v611
        %v773 = vpop.f32.mrf.mxu0
        %v774 = vadd.f32 %v561, %v773
        %v775 = vpop.f32.mrf.mxu0
        %v776 = vpop.f32.mrf.mxu0
        %v777 = vadd.f32 %v561, %v776
        %v778 = vpop.f32.mrf.mxu0
        %779 = vmatprep.mubr.bf16.mxu0 %v614
        %780 = vmatmul.mubr.bf16.gmra.mxu0 %v613
        %v781 = vpop.f32.mrf.mxu0
        %v782 = vadd.f32 %v561, %v781
        %v783 = vpop.f32.mrf.mxu0
        %v784 = vpop.f32.mrf.mxu0
        %v785 = vadd.f32 %v561, %v784
        %v786 = vpop.f32.mrf.mxu0
        %787 = vmatprep.mubr.bf16.mxu0 %v616
        %788 = vmatmul.mubr.bf16.gmra.mxu0 %v615
        %v789 = vpop.f32.mrf.mxu0
        %v790 = vadd.f32 %v561, %v789
        %v791 = vpop.f32.mrf.mxu0
        %v792 = vpop.f32.mrf.mxu0
        %v793 = vadd.f32 %v561, %v792
        %v794 = vpop.f32.mrf.mxu0
        %795 = vmatprep.mubr.bf16.mxu0 %v618
        %796 = vmatmul.mubr.bf16.gmra.mxu0 %v617
        %v797 = vpop.f32.mrf.mxu0
        %v798 = vadd.f32 %v561, %v797
        %v799 = vpop.f32.mrf.mxu0
        %v800 = vpop.f32.mrf.mxu0
        %v801 = vadd.f32 %v561, %v800
        %v802 = vpop.f32.mrf.mxu0
        %803 = vmatprep.mubr.bf16.mxu0 %v620
        %804 = vmatmul.mubr.bf16.gmra.mxu0 %v619
        %v805 = vpop.f32.mrf.mxu0
        %v806 = vadd.f32 %v561, %v805
        %v807 = vpop.f32.mrf.mxu0
        %v808 = vpop.f32.mrf.mxu0
        %v809 = vadd.f32 %v561, %v808
        %v810 = vpop.f32.mrf.mxu0
        %811 = vmatprep.mubr.bf16.mxu0 %v622
        %812 = vmatmul.mubr.bf16.gmra.mxu0 %v621
        %v813 = vpop.f32.mrf.mxu0
        %v814 = vadd.f32 %v561, %v813
        %v815 = vpop.f32.mrf.mxu0
        %v816 = vpop.f32.mrf.mxu0
        %v817 = vadd.f32 %v561, %v816
        %v818 = vpop.f32.mrf.mxu0
        %819 = vmatprep.mubr.bf16.mxu0 %v624
        %820 = vmatmul.mubr.bf16.gmra.mxu0 %v623
        %v821 = vpop.f32.mrf.mxu0
        %v822 = vadd.f32 %v561, %v821
        %v823 = vpop.f32.mrf.mxu0
        %v824 = vpop.f32.mrf.mxu0
        %v825 = vadd.f32 %v561, %v824
        %v826 = vpop.f32.mrf.mxu0
        %827 = vmatprep.mubr.bf16.mxu0 %v626
        %828 = vmatmul.mubr.bf16.gmra.mxu0 %v625
        %v829 = vpop.f32.mrf.mxu0
        %v830 = vadd.f32 %v561, %v829
        %v831 = vpop.f32.mrf.mxu0
        %v832 = vpop.f32.mrf.mxu0
        %v833 = vadd.f32 %v561, %v832
        %v834 = vpop.f32.mrf.mxu0
        %835 = vdwg.mxu0
        %v836 = vmax.f32 %v774, 0.0
        %v837 = vmax.f32 %v777, 0.0
        %v838 = vmax.f32 %v782, 0.0
        %v839 = vmax.f32 %v785, 0.0
        %v840 = vmax.f32 %v790, 0.0
        %v841 = vmax.f32 %v793, 0.0
        %v842 = vmax.f32 %v798, 0.0
        %v843 = vmax.f32 %v801, 0.0
        %v844 = vmax.f32 %v806, 0.0
        %v845 = vmax.f32 %v809, 0.0
        %v846 = vmax.f32 %v814, 0.0
        %v847 = vmax.f32 %v817, 0.0
        %v848 = vmax.f32 %v822, 0.0
        %v849 = vmax.f32 %v825, 0.0
        %v850 = vmax.f32 %v830, 0.0
        %v851 = vmax.f32 %v833, 0.0
        %v852 = vpack.c.bf16 %v837, %v836
        %v853 = vpack.c.bf16 %v839, %v838
        %v854 = vpack.c.bf16 %v841, %v840
        %v855 = vpack.c.bf16 %v843, %v842
        %v856 = vpack.c.bf16 %v845, %v844
        %v857 = vpack.c.bf16 %v847, %v846
        %v858 = vpack.c.bf16 %v849, %v848
        %v859 = vpack.c.bf16 %v851, %v850
        %v860 = vld [vmem:[#allocation8] sm:$0xf]
        %v861 = vld [vmem:[#allocation8 + $0x4] sm:$0xf]
        %v862 = vld [vmem:[#allocation8 + $0x8] sm:$0xf]
        %v863 = vld [vmem:[#allocation8 + $0xc] sm:$0xf]
        %v864 = vld [vmem:[#allocation8 + $0x10] sm:$0xf]
        %v865 = vld [vmem:[#allocation8 + $0x14] sm:$0xf]
        %v866 = vld [vmem:[#allocation8 + $0x18] sm:$0xf]
        %v867 = vld [vmem:[#allocation8 + $0x1c] sm:$0xf]
        %v868 = vld [vmem:[#allocation8 + $0x20] sm:$0xf]
        %v869 = vld [vmem:[#allocation8 + $0x24] sm:$0xf]
        %v870 = vld [vmem:[#allocation8 + $0x28] sm:$0xf]
        %v871 = vld [vmem:[#allocation8 + $0x2c] sm:$0xf]
        %v872 = vld [vmem:[#allocation8 + $0x30] sm:$0xf]
        %v873 = vld [vmem:[#allocation8 + $0x34] sm:$0xf]
        %v874 = vld [vmem:[#allocation8 + $0x38] sm:$0xf]
        %v875 = vld [vmem:[#allocation8 + $0x3c] sm:$0xf]
        %v876 = vld [vmem:[%s6] sm:$0x1]
        %v878 = vlaneseq
        %v879 = vshrl.u32 %v878, 7
        %v880 = vsub.s32 0, %v879
        %v881 = vrot.slane %v876, %v880
        %v899 = vunpack.c.l.b16 %v860
        %v900 = vunpack.c.l.b16 %v861
        %v901 = vunpack.c.l.b16 %v862
        %v902 = vunpack.c.l.b16 %v863
        %v903 = vunpack.c.l.b16 %v864
        %v904 = vunpack.c.l.b16 %v865
        %v905 = vunpack.c.l.b16 %v866
        %v906 = vunpack.c.l.b16 %v867
        %v907 = vunpack.c.l.b16 %v868
        %v908 = vunpack.c.l.b16 %v869
        %v909 = vunpack.c.l.b16 %v870
        %v910 = vunpack.c.l.b16 %v871
        %v911 = vunpack.c.l.b16 %v872
        %v912 = vunpack.c.l.b16 %v873
        %v913 = vunpack.c.l.b16 %v874
        %v914 = vunpack.c.l.b16 %v875
        %v915 = vpack.c.b16 %v900, %v899
        %v916 = vpack.c.b16 %v902, %v901
        %v917 = vpack.c.b16 %v904, %v903
        %v918 = vpack.c.b16 %v906, %v905
        %v919 = vpack.c.b16 %v908, %v907
        %v920 = vpack.c.b16 %v910, %v909
        %v921 = vpack.c.b16 %v912, %v911
        %v922 = vpack.c.b16 %v914, %v913
        %931 = vmatprep.subr.bf16.mxu0 0
        %932 = vmatpush1.bf16.msra.mxu0 %v922
        %933 = vmatprep.subr.bf16.mxu0 0
        %934 = vmatpush1.bf16.msra.mxu0 %v921
        %935 = vmatprep.subr.bf16.mxu0 0
        %936 = vmatpush1.bf16.msra.mxu0 %v920
        %937 = vmatprep.subr.bf16.mxu0 0
        %938 = vmatpush1.bf16.msra.mxu0 %v919
        %939 = vmatprep.subr.bf16.mxu0 0
        %940 = vmatpush1.bf16.msra.mxu0 %v918
        %941 = vmatprep.subr.bf16.mxu0 0
        %942 = vmatpush1.bf16.msra.mxu0 %v917
        %943 = vmatprep.subr.bf16.mxu0 0
        %944 = vmatpush1.bf16.msra.mxu0 %v916
        %945 = vmatprep.subr.bf16.mxu0 0
        %946 = vmatpush1.bf16.msra.mxu0 %v915
        %947 = vmatprep.subr.bf16.mxu0 0
        %948 = vmatpush2.bf16.msra.mxu0 0
        %949 = vmatprep.subr.bf16.mxu0 0
        %950 = vmatpush2.bf16.msra.mxu0 0
        %951 = vmatprep.subr.bf16.mxu0 0
        %952 = vmatpush2.bf16.msra.mxu0 0
        %953 = vmatprep.subr.bf16.mxu0 0
        %954 = vmatpush2.bf16.msra.mxu0 0
        %955 = vmatprep.subr.bf16.mxu0 0
        %956 = vmatpush2.bf16.msra.mxu0 0
        %957 = vmatprep.subr.bf16.mxu0 0
        %958 = vmatpush2.bf16.msra.mxu0 0
        %959 = vmatprep.subr.bf16.mxu0 0
        %960 = vmatpush2.bf16.msra.mxu0 0
        %961 = vmatprep.subr.bf16.mxu0 0
        %962 = vmatpush2.bf16.msra.mxu0 0
        %963 = vmatprep.mubr.bf16.mxu0 0
        %964 = vmatmul.mubr.bf16.gmra.mxu0 %v852
        %v965 = vpop.f32.mrf.mxu0
        %v966 = vadd.f32 %v881, %v965
        %v967 = vpop.f32.mrf.mxu0
        %v968 = vpop.f32.mrf.mxu0
        %v969 = vadd.f32 %v881, %v968
        %v970 = vpop.f32.mrf.mxu0
        %971 = vmatprep.mubr.bf16.mxu0 0
        %972 = vmatmul.mubr.bf16.gmra.mxu0 %v853
        %v973 = vpop.f32.mrf.mxu0
        %v974 = vadd.f32 %v881, %v973
        %v975 = vpop.f32.mrf.mxu0
        %v976 = vpop.f32.mrf.mxu0
        %v977 = vadd.f32 %v881, %v976
        %v978 = vpop.f32.mrf.mxu0
        %979 = vmatprep.mubr.bf16.mxu0 0
        %980 = vmatmul.mubr.bf16.gmra.mxu0 %v854
        %v981 = vpop.f32.mrf.mxu0
        %v982 = vadd.f32 %v881, %v981
        %v983 = vpop.f32.mrf.mxu0
        %v984 = vpop.f32.mrf.mxu0
        %v985 = vadd.f32 %v881, %v984
        %v986 = vpop.f32.mrf.mxu0
        %987 = vmatprep.mubr.bf16.mxu0 0
        %988 = vmatmul.mubr.bf16.gmra.mxu0 %v855
        %v989 = vpop.f32.mrf.mxu0
        %v990 = vadd.f32 %v881, %v989
        %v991 = vpop.f32.mrf.mxu0
        %v992 = vpop.f32.mrf.mxu0
        %v993 = vadd.f32 %v881, %v992
        %v994 = vpop.f32.mrf.mxu0
        %995 = vmatprep.mubr.bf16.mxu0 0
        %996 = vmatmul.mubr.bf16.gmra.mxu0 %v856
        %v997 = vpop.f32.mrf.mxu0
        %v998 = vadd.f32 %v881, %v997
        %v999 = vpop.f32.mrf.mxu0
        %v1000 = vpop.f32.mrf.mxu0
        %v1001 = vadd.f32 %v881, %v1000
        %v1002 = vpop.f32.mrf.mxu0
        %1003 = vmatprep.mubr.bf16.mxu0 0
        %1004 = vmatmul.mubr.bf16.gmra.mxu0 %v857
        %v1005 = vpop.f32.mrf.mxu0
        %v1006 = vadd.f32 %v881, %v1005
        %v1007 = vpop.f32.mrf.mxu0
        %v1008 = vpop.f32.mrf.mxu0
        %v1009 = vadd.f32 %v881, %v1008
        %v1010 = vpop.f32.mrf.mxu0
        %1011 = vmatprep.mubr.bf16.mxu0 0
        %1012 = vmatmul.mubr.bf16.gmra.mxu0 %v858
        %v1013 = vpop.f32.mrf.mxu0
        %v1014 = vadd.f32 %v881, %v1013
        %v1015 = vpop.f32.mrf.mxu0
        %v1016 = vpop.f32.mrf.mxu0
        %v1017 = vadd.f32 %v881, %v1016
        %v1018 = vpop.f32.mrf.mxu0
        %1019 = vmatprep.mubr.bf16.mxu0 0
        %1020 = vmatmul.mubr.bf16.gmra.mxu0 %v859
        %v1021 = vpop.f32.mrf.mxu0
        %v1022 = vadd.f32 %v881, %v1021
        %v1023 = vpop.f32.mrf.mxu0
        %v1024 = vpop.f32.mrf.mxu0
        %v1025 = vadd.f32 %v881, %v1024
        %v1026 = vpop.f32.mrf.mxu0
        %1027 = vdwg.mxu0
        %v1028 = vmax.f32 %v966, 0.0
        %v1029 = vmax.f32 %v969, 0.0
        %v1030 = vmax.f32 %v974, 0.0
        %v1031 = vmax.f32 %v977, 0.0
        %v1032 = vmax.f32 %v982, 0.0
        %v1033 = vmax.f32 %v985, 0.0
        %v1034 = vmax.f32 %v990, 0.0
        %v1035 = vmax.f32 %v993, 0.0
        %v1036 = vmax.f32 %v998, 0.0
        %v1037 = vmax.f32 %v1001, 0.0
        %v1038 = vmax.f32 %v1006, 0.0
        %v1039 = vmax.f32 %v1009, 0.0
        %v1040 = vmax.f32 %v1014, 0.0
        %v1041 = vmax.f32 %v1017, 0.0
        %v1042 = vmax.f32 %v1022, 0.0
        %v1043 = vmax.f32 %v1025, 0.0
        %v1044 = vpack.c.bf16 %v1029, %v1028
        %v1045 = vpack.c.bf16 %v1031, %v1030
        %v1046 = vpack.c.bf16 %v1033, %v1032
        %v1047 = vpack.c.bf16 %v1035, %v1034
        %v1048 = vpack.c.bf16 %v1037, %v1036
        %v1049 = vpack.c.bf16 %v1039, %v1038
        %v1050 = vpack.c.bf16 %v1041, %v1040
        %v1051 = vpack.c.bf16 %v1043, %v1042
        %v1052 = vld [vmem:[%s2] sm:$0x1]
        %v1053 = vlaneseq
        %v1054 = vshrl.u32 %v1053, 7
        %v1055 = vlaneseq
        %v1056 = vshrl.u32 %v1055, 7
        %v1057 = vsub.s32 0, %v1056
        %v1058 = vrot.slane %v1052, %v1057
        %vm1059 = vcmp.eq.s32.totalorder %v1054, %v1058
        %v1060 = vsel %vm1059, 1, 0
        %v1061 = vcvt.s32.f32 %v1060
        %v1062 = vpack.c.bf16 %v1061, %v1061
        %vm1063 = vcmask 523264
        %v1065 = vsel %vm1063, %v1062, 0
        %1067 = vmatprep.subr.bf16.mxu0 0
        %1068 = vmatpush1.bf16.msra.mxu0 0
        %1069 = vmatprep.subr.bf16.mxu0 0
        %1070 = vmatpush1.bf16.msra.mxu0 0
        %1071 = vmatprep.subr.bf16.mxu0 0
        %1072 = vmatpush1.bf16.msra.mxu0 0
        %1073 = vmatprep.subr.bf16.mxu0 0
        %1074 = vmatpush1.bf16.msra.mxu0 0
        %1075 = vmatprep.subr.bf16.mxu0 0
        %1076 = vmatpush1.bf16.msra.mxu0 %v1047
        %1077 = vmatprep.subr.bf16.mxu0 0
        %1078 = vmatpush1.bf16.msra.mxu0 %v1046
        %1079 = vmatprep.subr.bf16.mxu0 0
        %1080 = vmatpush1.bf16.msra.mxu0 %v1045
        %1081 = vmatprep.subr.bf16.mxu0 0
        %1082 = vmatpush1.bf16.msra.mxu0 %v1044
        %1083 = vmatprep.subr.bf16.mxu0 0
        %1084 = vmatpush2.bf16.msra.mxu0 0
        %1085 = vmatprep.subr.bf16.mxu0 0
        %1086 = vmatpush2.bf16.msra.mxu0 0
        %1087 = vmatprep.subr.bf16.mxu0 0
        %1088 = vmatpush2.bf16.msra.mxu0 0
        %1089 = vmatprep.subr.bf16.mxu0 0
        %1090 = vmatpush2.bf16.msra.mxu0 0
        %1091 = vmatprep.subr.bf16.mxu0 0
        %1092 = vmatpush2.bf16.msra.mxu0 0
        %1093 = vmatprep.subr.bf16.mxu0 0
        %1094 = vmatpush2.bf16.msra.mxu0 0
        %1095 = vmatprep.subr.bf16.mxu0 0
        %1096 = vmatpush2.bf16.msra.mxu0 0
        %1097 = vmatprep.subr.bf16.mxu0 0
        %1098 = vmatpush2.bf16.msra.mxu0 0
        %1099 = vmatprep.mubr.bf16.mxu0 0
        %1100 = vmatmul.mubr.bf16.gmra.mxu0 %v1065
        %v1101 = vpop.f32.mrf.mxu0
        %v1102 = vadd.f32 0.0, %v1101
        %v1103 = vpop.f32.mrf.mxu0
        %v1104 = vpop.f32.mrf.mxu0
        %v1105 = vpop.f32.mrf.mxu0
        %1106 = vdwg.mxu0
        %1107 = vmatprep.subr.bf16.mxu0 0
        %1108 = vmatpush1.bf16.msra.mxu0 0
        %1109 = vmatprep.subr.bf16.mxu0 0
        %1110 = vmatpush1.bf16.msra.mxu0 0
        %1111 = vmatprep.subr.bf16.mxu0 0
        %1112 = vmatpush1.bf16.msra.mxu0 0
        %1113 = vmatprep.subr.bf16.mxu0 0
        %1114 = vmatpush1.bf16.msra.mxu0 0
        %1115 = vmatprep.subr.bf16.mxu0 0
        %1116 = vmatpush1.bf16.msra.mxu0 %v1051
        %1117 = vmatprep.subr.bf16.mxu0 0
        %1118 = vmatpush1.bf16.msra.mxu0 %v1050
        %1119 = vmatprep.subr.bf16.mxu0 0
        %1120 = vmatpush1.bf16.msra.mxu0 %v1049
        %1121 = vmatprep.subr.bf16.mxu0 0
        %1122 = vmatpush1.bf16.msra.mxu0 %v1048
        %1123 = vmatprep.subr.bf16.mxu0 0
        %1124 = vmatpush2.bf16.msra.mxu0 0
        %1125 = vmatprep.subr.bf16.mxu0 0
        %1126 = vmatpush2.bf16.msra.mxu0 0
        %1127 = vmatprep.subr.bf16.mxu0 0
        %1128 = vmatpush2.bf16.msra.mxu0 0
        %1129 = vmatprep.subr.bf16.mxu0 0
        %1130 = vmatpush2.bf16.msra.mxu0 0
        %1131 = vmatprep.subr.bf16.mxu0 0
        %1132 = vmatpush2.bf16.msra.mxu0 0
        %1133 = vmatprep.subr.bf16.mxu0 0
        %1134 = vmatpush2.bf16.msra.mxu0 0
        %1135 = vmatprep.subr.bf16.mxu0 0
        %1136 = vmatpush2.bf16.msra.mxu0 0
        %1137 = vmatprep.subr.bf16.mxu0 0
        %1138 = vmatpush2.bf16.msra.mxu0 0
        %1139 = vmatprep.mubr.bf16.mxu0 0
        %1140 = vmatmul.mubr.bf16.gmra.mxu0 %v1065
        %v1141 = vpop.f32.mrf.mxu0
        %v1142 = vadd.f32 0.0, %v1141
        %v1143 = vpop.f32.mrf.mxu0
        %v1144 = vpop.f32.mrf.mxu0
        %v1145 = vpop.f32.mrf.mxu0
        %1146 = vdwg.mxu0
        %v1147 = vld [vmem:[%s444] sm:$0xff]
        %v1148 = vld [vmem:[%s444 + $0x8] sm:$0xff]
        %v1149 = vpack.c.bf16 %v1148, %v1147
        %v1150 = vpack.c.bf16 %v1142, %v1102
        %v1151 = vld [vmem:[#allocation10] sm:$0xf]
        %v1152 = vld [vmem:[#allocation10 + $0x4] sm:$0xf]
        %v1153 = vld [vmem:[#allocation10 + $0x8] sm:$0xf]
        %v1154 = vld [vmem:[#allocation10 + $0xc] sm:$0xf]
        %v1155 = vld [vmem:[#allocation10 + $0x10] sm:$0xf]
        %v1156 = vld [vmem:[#allocation10 + $0x14] sm:$0xf]
        %v1157 = vld [vmem:[#allocation10 + $0x18] sm:$0xf]
        %v1158 = vld [vmem:[#allocation10 + $0x1c] sm:$0xf]
        %v1159 = vld [vmem:[#allocation10 + $0x20] sm:$0xf]
        %v1160 = vld [vmem:[#allocation10 + $0x24] sm:$0xf]
        %v1161 = vld [vmem:[#allocation10 + $0x28] sm:$0xf]
        %v1162 = vld [vmem:[#allocation10 + $0x2c] sm:$0xf]
        %v1163 = vld [vmem:[#allocation10 + $0x30] sm:$0xf]
        %v1164 = vld [vmem:[#allocation10 + $0x34] sm:$0xf]
        %v1165 = vld [vmem:[#allocation10 + $0x38] sm:$0xf]
        %v1166 = vld [vmem:[#allocation10 + $0x3c] sm:$0xf]
        %v1167 = vld [vmem:[#allocation10 + $0x40] sm:$0xf]
        %v1168 = vld [vmem:[#allocation10 + $0x44] sm:$0xf]
        %v1169 = vld [vmem:[#allocation10 + $0x48] sm:$0xf]
        %v1170 = vld [vmem:[#allocation10 + $0x4c] sm:$0xf]
        %v1171 = vld [vmem:[#allocation10 + $0x50] sm:$0xf]
        %v1172 = vld [vmem:[#allocation10 + $0x54] sm:$0xf]
        %v1173 = vld [vmem:[#allocation10 + $0x58] sm:$0xf]
        %v1174 = vld [vmem:[#allocation10 + $0x5c] sm:$0xf]
        %v1175 = vld [vmem:[#allocation10 + $0x60] sm:$0xf]
        %v1176 = vld [vmem:[#allocation10 + $0x64] sm:$0xf]
        %v1177 = vld [vmem:[#allocation10 + $0x68] sm:$0xf]
        %v1178 = vld [vmem:[#allocation10 + $0x6c] sm:$0xf]
        %v1179 = vld [vmem:[#allocation10 + $0x70] sm:$0xf]
        %v1180 = vld [vmem:[#allocation10 + $0x74] sm:$0xf]
        %v1181 = vld [vmem:[#allocation10 + $0x78] sm:$0xf]
        %v1182 = vld [vmem:[#allocation10 + $0x7c] sm:$0xf]
        %v1183 = vld [vmem:[%s8] sm:$0x1]
        %v1185 = vlaneseq
        %v1186 = vshrl.u32 %v1185, 7
        %v1187 = vsub.s32 0, %v1186
        %v1188 = vrot.slane %v1183, %v1187
        %v1222 = vunpack.c.l.b16 %v1151
        %v1223 = vunpack.c.l.b16 %v1152
        %v1224 = vunpack.c.l.b16 %v1153
        %v1225 = vunpack.c.l.b16 %v1154
        %v1226 = vunpack.c.l.b16 %v1155
        %v1227 = vunpack.c.l.b16 %v1156
        %v1228 = vunpack.c.l.b16 %v1157
        %v1229 = vunpack.c.l.b16 %v1158
        %v1230 = vunpack.c.l.b16 %v1159
        %v1231 = vunpack.c.l.b16 %v1160
        %v1232 = vunpack.c.l.b16 %v1161
        %v1233 = vunpack.c.l.b16 %v1162
        %v1234 = vunpack.c.l.b16 %v1163
        %v1235 = vunpack.c.l.b16 %v1164
        %v1236 = vunpack.c.l.b16 %v1165
        %v1237 = vunpack.c.l.b16 %v1166
        %v1238 = vunpack.c.l.b16 %v1167
        %v1239 = vunpack.c.l.b16 %v1168
        %v1240 = vunpack.c.l.b16 %v1169
        %v1241 = vunpack.c.l.b16 %v1170
        %v1242 = vunpack.c.l.b16 %v1171
        %v1243 = vunpack.c.l.b16 %v1172
        %v1244 = vunpack.c.l.b16 %v1173
        %v1245 = vunpack.c.l.b16 %v1174
        %v1246 = vunpack.c.l.b16 %v1175
        %v1247 = vunpack.c.l.b16 %v1176
        %v1248 = vunpack.c.l.b16 %v1177
        %v1249 = vunpack.c.l.b16 %v1178
        %v1250 = vunpack.c.l.b16 %v1179
        %v1251 = vunpack.c.l.b16 %v1180
        %v1252 = vunpack.c.l.b16 %v1181
        %v1253 = vunpack.c.l.b16 %v1182
        %v1254 = vpack.c.b16 %v1223, %v1222
        %v1255 = vpack.c.b16 %v1225, %v1224
        %v1256 = vpack.c.b16 %v1227, %v1226
        %v1257 = vpack.c.b16 %v1229, %v1228
        %v1258 = vpack.c.b16 %v1231, %v1230
        %v1259 = vpack.c.b16 %v1233, %v1232
        %v1260 = vpack.c.b16 %v1235, %v1234
        %v1261 = vpack.c.b16 %v1237, %v1236
        %v1262 = vpack.c.b16 %v1239, %v1238
        %v1263 = vpack.c.b16 %v1241, %v1240
        %v1264 = vpack.c.b16 %v1243, %v1242
        %v1265 = vpack.c.b16 %v1245, %v1244
        %v1266 = vpack.c.b16 %v1247, %v1246
        %v1267 = vpack.c.b16 %v1249, %v1248
        %v1268 = vpack.c.b16 %v1251, %v1250
        %v1269 = vpack.c.b16 %v1253, %v1252
        %1286 = vmatprep.subr.bf16.mxu0 0
        %1287 = vmatpush1.bf16.msra.mxu0 %v1261
        %1288 = vmatprep.subr.bf16.mxu0 0
        %1289 = vmatpush1.bf16.msra.mxu0 %v1260
        %1290 = vmatprep.subr.bf16.mxu0 0
        %1291 = vmatpush1.bf16.msra.mxu0 %v1259
        %1292 = vmatprep.subr.bf16.mxu0 0
        %1293 = vmatpush1.bf16.msra.mxu0 %v1258
        %1294 = vmatprep.subr.bf16.mxu0 0
        %1295 = vmatpush1.bf16.msra.mxu0 %v1257
        %1296 = vmatprep.subr.bf16.mxu0 0
        %1297 = vmatpush1.bf16.msra.mxu0 %v1256
        %1298 = vmatprep.subr.bf16.mxu0 0
        %1299 = vmatpush1.bf16.msra.mxu0 %v1255
        %1300 = vmatprep.subr.bf16.mxu0 0
        %1301 = vmatpush1.bf16.msra.mxu0 %v1254
        %1302 = vmatprep.subr.bf16.mxu0 0
        %1303 = vmatpush2.bf16.msra.mxu0 %v1269
        %1304 = vmatprep.subr.bf16.mxu0 0
        %1305 = vmatpush2.bf16.msra.mxu0 %v1268
        %1306 = vmatprep.subr.bf16.mxu0 0
        %1307 = vmatpush2.bf16.msra.mxu0 %v1267
        %1308 = vmatprep.subr.bf16.mxu0 0
        %1309 = vmatpush2.bf16.msra.mxu0 %v1266
        %1310 = vmatprep.subr.bf16.mxu0 0
        %1311 = vmatpush2.bf16.msra.mxu0 %v1265
        %1312 = vmatprep.subr.bf16.mxu0 0
        %1313 = vmatpush2.bf16.msra.mxu0 %v1264
        %1314 = vmatprep.subr.bf16.mxu0 0
        %1315 = vmatpush2.bf16.msra.mxu0 %v1263
        %1316 = vmatprep.subr.bf16.mxu0 0
        %1317 = vmatpush2.bf16.msra.mxu0 %v1262
        %1318 = vmatprep.mubr.bf16.mxu0 %v1150
        %1319 = vmatmul.mubr.bf16.gmra.mxu0 %v1149
        %v1320 = vpop.f32.mrf.mxu0
        %v1321 = vadd.f32 %v1188, %v1320
        %v1322 = vpop.f32.mrf.mxu0
        %v1323 = vpop.f32.mrf.mxu0
        %v1324 = vadd.f32 %v1188, %v1323
        %v1325 = vpop.f32.mrf.mxu0
        %1326 = vdwg.mxu0
        %v1327 = vmax.f32 %v1321, 0.0
        %v1328 = vmax.f32 %v1324, 0.0
        %v1329 = vpack.c.bf16 %v1328, %v1327
        %v1330 = vld [vmem:[#allocation11] sm:$0xf]
        %v1331 = vld [vmem:[#allocation11 + $0x4] sm:$0xf]
        %v1332 = vld [vmem:[#allocation11 + $0x8] sm:$0xf]
        %v1333 = vld [vmem:[#allocation11 + $0xc] sm:$0xf]
        %v1334 = vld [vmem:[#allocation11 + $0x10] sm:$0xf]
        %v1335 = vld [vmem:[#allocation11 + $0x14] sm:$0xf]
        %v1336 = vld [vmem:[#allocation11 + $0x18] sm:$0xf]
        %v1337 = vld [vmem:[#allocation11 + $0x1c] sm:$0xf]
        %v1338 = vld [vmem:[#allocation11 + $0x20] sm:$0xf]
        %v1339 = vld [vmem:[#allocation11 + $0x24] sm:$0xf]
        %v1340 = vld [vmem:[#allocation11 + $0x28] sm:$0xf]
        %v1341 = vld [vmem:[#allocation11 + $0x2c] sm:$0xf]
        %v1342 = vld [vmem:[#allocation11 + $0x30] sm:$0xf]
        %v1343 = vld [vmem:[#allocation11 + $0x34] sm:$0xf]
        %v1344 = vld [vmem:[#allocation11 + $0x38] sm:$0xf]
        %v1345 = vld [vmem:[#allocation11 + $0x3c] sm:$0xf]
        %v1346 = vld [vmem:[%s10] sm:$0x1]
        %v1348 = vlaneseq
        %v1349 = vshrl.u32 %v1348, 7
        %v1350 = vsub.s32 0, %v1349
        %v1351 = vrot.slane %v1346, %v1350
        %v1369 = vunpack.c.l.b16 %v1330
        %v1370 = vunpack.c.l.b16 %v1331
        %v1371 = vunpack.c.l.b16 %v1332
        %v1372 = vunpack.c.l.b16 %v1333
        %v1373 = vunpack.c.l.b16 %v1334
        %v1374 = vunpack.c.l.b16 %v1335
        %v1375 = vunpack.c.l.b16 %v1336
        %v1376 = vunpack.c.l.b16 %v1337
        %v1377 = vunpack.c.l.b16 %v1338
        %v1378 = vunpack.c.l.b16 %v1339
        %v1379 = vunpack.c.l.b16 %v1340
        %v1380 = vunpack.c.l.b16 %v1341
        %v1381 = vunpack.c.l.b16 %v1342
        %v1382 = vunpack.c.l.b16 %v1343
        %v1383 = vunpack.c.l.b16 %v1344
        %v1384 = vunpack.c.l.b16 %v1345
        %v1385 = vpack.c.b16 %v1370, %v1369
        %v1386 = vpack.c.b16 %v1372, %v1371
        %v1387 = vpack.c.b16 %v1374, %v1373
        %v1388 = vpack.c.b16 %v1376, %v1375
        %v1389 = vpack.c.b16 %v1378, %v1377
        %v1390 = vpack.c.b16 %v1380, %v1379
        %v1391 = vpack.c.b16 %v1382, %v1381
        %v1392 = vpack.c.b16 %v1384, %v1383
        %1401 = vmatprep.subr.bf16.mxu0 0
        %1402 = vmatpush1.bf16.msra.mxu0 %v1392
        %1403 = vmatprep.subr.bf16.mxu0 0
        %1404 = vmatpush1.bf16.msra.mxu0 %v1391
        %1405 = vmatprep.subr.bf16.mxu0 0
        %1406 = vmatpush1.bf16.msra.mxu0 %v1390
        %1407 = vmatprep.subr.bf16.mxu0 0
        %1408 = vmatpush1.bf16.msra.mxu0 %v1389
        %1409 = vmatprep.subr.bf16.mxu0 0
        %1410 = vmatpush1.bf16.msra.mxu0 %v1388
        %1411 = vmatprep.subr.bf16.mxu0 0
        %1412 = vmatpush1.bf16.msra.mxu0 %v1387
        %1413 = vmatprep.subr.bf16.mxu0 0
        %1414 = vmatpush1.bf16.msra.mxu0 %v1386
        %1415 = vmatprep.subr.bf16.mxu0 0
        %1416 = vmatpush1.bf16.msra.mxu0 %v1385
        %1417 = vmatprep.subr.bf16.mxu0 0
        %1418 = vmatpush2.bf16.msra.mxu0 0
        %1419 = vmatprep.subr.bf16.mxu0 0
        %1420 = vmatpush2.bf16.msra.mxu0 0
        %1421 = vmatprep.subr.bf16.mxu0 0
        %1422 = vmatpush2.bf16.msra.mxu0 0
        %1423 = vmatprep.subr.bf16.mxu0 0
        %1424 = vmatpush2.bf16.msra.mxu0 0
        %1425 = vmatprep.subr.bf16.mxu0 0
        %1426 = vmatpush2.bf16.msra.mxu0 0
        %1427 = vmatprep.subr.bf16.mxu0 0
        %1428 = vmatpush2.bf16.msra.mxu0 0
        %1429 = vmatprep.subr.bf16.mxu0 0
        %1430 = vmatpush2.bf16.msra.mxu0 0
        %1431 = vmatprep.subr.bf16.mxu0 0
        %1432 = vmatpush2.bf16.msra.mxu0 0
        %1433 = vmatprep.mubr.bf16.mxu0 0
        %1434 = vmatmul.mubr.bf16.gmra.mxu0 %v1329
        %v1435 = vpop.f32.mrf.mxu0
        %v1436 = vadd.f32 %v1351, %v1435
        %v1437 = vpop.f32.mrf.mxu0
        %v1438 = vpop.f32.mrf.mxu0
        %v1439 = vadd.f32 %v1351, %v1438
        %v1440 = vpop.f32.mrf.mxu0
        %1441 = vdwg.mxu0
        %v1442 = vadd.f32 %v1436, %v1147
        %v1443 = vadd.f32 %v1439, %v1148
        %1444 = vst [vmem:[%s503] sm:$0xff] %v1442
        %1445 = vst [vmem:[%s503 + $0x8] sm:$0xff] %v1443
        %s1446 = sand.u32 %s282, 1
        %s1447 = scalar_lea.sflag [#allocation4], %s1446
        %s1448 = sand.u32 %s282, 1
        %s1449 = smul.addr %s1448, 16
        %s1450 = scalar_lea.vmem [#allocation13], %s1449
        // Predicated region
        $region89: #{tpu_custom_call.1} parent=63 // pred_check
          %p1451 = pneg %p292
        $region90: #{tpu_custom_call.1} parent=63 // pred_check_branch
          %1453 = sbr.rel (%p1451) target = $region92
        $region91: #{tpu_custom_call.1} parent=63 // pred_region
          %s1454 = smul.u32 2, %s33
          %s1456 = ssub.s32 256, 256
          %1457 = vsyncadd %s1447, %s1456
          %s1458 = smul.addr %s1454, 128
          %s1459 = scalar_lea.hbm %s11, %s1458
          %s1460 = sshll.u32 %s1450, 4
          %s1461 = int_to_ptr.vmem [resolvable:$true] %s1460
          %1466 = dma.vmem_to_hbm [thread:$0]  %s1461, 256, %s1459, %s1447, 128, 128, 8
        $region92: #{tpu_custom_call.1} parent=63 // pred_fallthru
          _
      $region64: #{tpu_custom_call.1} parent=5 // pred_fallthru
        _
      %p1467 = scmp.le.s32.totalorder 2, %s28
      // Predicated region
      $region93: #{tpu_custom_call.1} parent=5 // pred_check
        %p1468 = pneg %p1467
      $region94: #{tpu_custom_call.1} parent=5 // pred_check_branch
        %1470 = sbr.rel (%p1468) target = $region96
      $region95: #{tpu_custom_call.1} parent=5 // pred_region
        %s1471 = ssub.s32 %s28, 2
        // Predicated region
        $region97: #{tpu_custom_call.1} parent=95 // pred_check
          %p1472 = pneg %p298
        $region98: #{tpu_custom_call.1} parent=95 // pred_check_branch
          %1474 = sbr.rel (%p1472) target = $region100
        $region99: #{tpu_custom_call.1} parent=95 // pred_region
          %s1475 = sand.u32 %s283, 1
          %s1476 = scalar_lea.sflag [#allocation4], %s1475
          %s1477 = sand.u32 %s283, 1
          %s1478 = smul.addr %s1477, 16
          %s1479 = scalar_lea.vmem [#allocation13], %s1478
          %1480 = dma.done %s1476, 256
        $region100: #{tpu_custom_call.1} parent=95 // pred_fallthru
          _
      $region96: #{tpu_custom_call.1} parent=5 // pred_fallthru
        _
    $region6: #{tpu_custom_call.1} parent=1 // loop_footer
      %s32 = sadd.s32 1, %s28
    $region7: #{tpu_custom_call.1} parent=1 // loop_footer_branch
      %27 = sbr.rel target = $region3
    $region8: #{tpu_custom_call.1} parent=1 // loop_exit
      _
    %1481 = vsyncpa [#allocation3], 1
    %s1482 = scalar_lea.sflag [#allocation3], 1
    %1483 = vsyncpa %s1482, 1
    %1484 = vsyncpa [#allocation6], 1
    %s1485 = scalar_lea.sflag [#allocation6], 1
    %1486 = vsyncpa %s1485, 1
    %1487 = vsyncpa [#allocation9], 1
    %1488 = vsyncpa [#allocation12], 1
    %1489 = vsyncpa [#allocation4], 1
    %s1490 = scalar_lea.sflag [#allocation4], 1
    %1491 = vsyncpa %s1490, 1

</llo_original>
